<compile_context>
chip_gen: v5e
topology: v5e:2x2
jax: 0.10.0
libtpu: 0.0.40
codegen_flags: <defaults>
</compile_context>

<pallas_src>
import math

import jax
import jax.numpy as jnp
from jax.experimental import pallas as pl
from jax.experimental.pallas import tpu as pltpu

N_QUBITS = 3
N_FUZZY = 2
N_COMBO = N_FUZZY ** N_QUBITS      # 8
D_IN = 10
D_OUT = 10
EPS_GN = 1e-5
EPS_BN = 1e-5
HALF_PI = math.pi / 2.0


def _round_up(n, m):
    return ((n + m - 1) // m) * m


def _arcsin(x):
    """arcsin for x in [0, 0.99999]: A&S 4.4.45 seed + 1 Newton step.

    Max error ~5e-7 over the clipped domain; uses only sqrt/sin/cos/div so it
    lowers cleanly in Mosaic (no reliance on a native asin lowering).
    """
    a0, a1, a2, a3 = 1.5707288, -0.2121144, 0.0742610, -0.0187293
    y = HALF_PI - jnp.sqrt(1.0 - x) * (a0 + x * (a1 + x * (a2 + x * a3)))
    return y - (jnp.sin(y) - x) / jnp.cos(y)


# ----------------------------------------------------------------------------
# Stage 1: Linear(10,3) + GroupNorm(1,3) + fuzzification + quantum t-norm.
# Layout: batch on lanes, features on sublanes.  Block: (features, TB).
# ----------------------------------------------------------------------------
def qfnn_stage1_kernel(x_ref, w1_ref, b1_ref, gnw_ref, gnb_ref,
                       m_ref, ninv_ref, tsh_ref, q_ref):
    tb = x_ref.shape[1]
    xT = x_ref[...]                                                   # (10, TB)

    # Linear(10 -> 3), weight-stationary: (3,10) @ (10,TB) -> lane-dense (3,TB)
    h = jnp.dot(w1_ref[...], xT, preferred_element_type=jnp.float32) + b1_ref[...]

    # GroupNorm(1 group, 3 channels): per-sample (per-column) normalization.
    third = 1.0 / 3.0
    mu = (h[0:1, :] + h[1:2, :] + h[2:3, :]) * third                  # (1, TB)
    d = h - mu
    dd = d * d
    var = (dd[0:1, :] + dd[1:2, :] + dd[2:3, :]) * third
    hg = d * jax.lax.rsqrt(var + EPS_GN) * gnw_ref[...] + gnb_ref[...]  # (3, TB)

    # Gaussian fuzzification, both memberships stacked on sublanes:
    # rows 0..2 -> membership 0, rows 3..5 -> membership 1.  One exp / arcsin.
    hg2 = jnp.concatenate([hg, hg], axis=0)                           # (6, TB)
    dm = hg2 - m_ref[...]
    fz = jnp.exp(dm * dm * ninv_ref[...])                             # ninv = -1/(2 theta^2)
    sq = jnp.minimum(jnp.sqrt(fz + 1e-16), 0.99999)
    ang = 2.0 * _arcsin(sq)                                           # (6, TB)

    # 6 parameter shifts of the t-norm thetas. tsh[r, k] = 0.5*theta_shift_k[r % 3].
    tsh = tsh_ref[...]                                                # (6, 6)
    acc = [jnp.zeros((1, tb), jnp.float32) for _ in range(N_COMBO)]
    for k in range(2 * N_QUBITS):
        s = jnp.sin(ang * tsh[:, k:k + 1])
        s = s * s                                                     # P(qubit_j = 1), (6, TB)
        # 5-qubit circuit RY + CCX(0,1,3) + CCX(2,3,4):
        #   P(basis state 1) = p0 * (1 - p1) * (1 - p2)
        sA = (s[0:1, :], s[3:4, :])
        cB = (1.0 - s[1:2, :], 1.0 - s[4:5, :])
        cC = (1.0 - s[2:3, :], 1.0 - s[5:6, :])
        cBC = ((cB[0] * cC[0], cB[0] * cC[1]),
               (cB[1] * cC[0], cB[1] * cC[1]))
        for i in range(N_COMBO):
            b0, b1, b2 = (i >> 2) & 1, (i >> 1) & 1, i & 1            # loc[j] bits of rule i
            acc[i] = acc[i] + sA[b0] * cBC[b1][b2]
    inv = 1.0 / (2 * N_QUBITS)                                        # mean over 6 shifted evals
    q_ref[...] = jnp.concatenate([a * inv for a in acc], axis=0)      # (8, TB), unmasked store


# ----------------------------------------------------------------------------
# Stage 2: BN(8) folded into the linear -> single matmul (10,8)@(8,TB) + bias.
# ----------------------------------------------------------------------------
def qfnn_stage2_kernel(q_ref, w2_ref, b2_ref, o_ref):
    o_ref[...] = jnp.dot(w2_ref[...], q_ref[...],
                         preferred_element_type=jnp.float32) + b2_ref[...]  # (10, TB)


def _param_spec(shape):
    return pl.BlockSpec(shape, lambda i: (0,) * len(shape))


def _defuzz_vector(theta):
    """LearnableDefuzz closed form (ignores its input values; pure parameter math)."""
    def probs(t):
        sn = jnp.sin(0.5 * t)
        p = sn * sn
        c = 1.0 - p
        return jnp.stack([c[0] * c[1] * c[2],    # probs[0]
                          p[0] * c[1] * c[2],    # probs[1]
                          c[0] * p[1] * c[2]])   # probs[2]
    acc = jnp.zeros((3,), jnp.float32)
    for i in range(3):
        e = jnp.zeros((3,), jnp.float32).at[i].set(HALF_PI)
        acc = acc + 0.5 * (probs(theta + e) + probs(theta - e))
    return acc / 3.0


def init_params(key):
    ks = jax.random.split(key, 6)
    bound1 = math.sqrt(6.0 / (D_IN + N_QUBITS))     # xavier_uniform for Linear(10,3)
    bound2 = math.sqrt(6.0 / (N_COMBO + D_OUT))     # xavier_uniform for Linear(8,10)
    return dict(
        w1=jax.random.uniform(ks[0], (N_QUBITS, D_IN), jnp.float32, -bound1, bound1),
        b1=jnp.full((N_QUBITS,), 0.01, jnp.float32),
        gn_w=jnp.ones((N_QUBITS,), jnp.float32),
        gn_b=jnp.zeros((N_QUBITS,), jnp.float32),
        m=jax.random.normal(ks[1], (N_QUBITS, N_FUZZY), dtype=jnp.float32),
        theta=jax.random.normal(ks[2], (N_QUBITS, N_FUZZY), dtype=jnp.float32),
        theta_tnorm=jax.random.normal(ks[3], (N_QUBITS,), dtype=jnp.float32),
        bn_g=jnp.ones((N_COMBO,), jnp.float32),
        bn_b=jnp.zeros((N_COMBO,), jnp.float32),
        w2=jax.random.uniform(ks[4], (D_OUT, N_COMBO), jnp.float32, -bound2, bound2),
        b2=jnp.full((D_OUT,), 0.01, jnp.float32),
        theta_defuzz=jax.random.normal(ks[5], (N_QUBITS,), dtype=jnp.float32),
    )


def qfnn_forward(x, params, *, block_b=1024):
    """Returns (module output (B,3), pre-defuzz logits (B,10))."""
    B = x.shape[0]
    x = x.astype(jnp.float32)

    # Batch tile size: multiple of 128 lanes.  Per-tile VMEM footprint is tiny
    # (< 100 KiB at TB=1024), so larger tiles just amortize per-step overhead.
    tb = min(block_b, _round_up(B, 128))
    bp = _round_up(B, tb)
    grid = (bp // tb,)
    xT = jnp.pad(x, ((0, bp - B), (0, 0))).T                          # (10, Bp)

    # ---- small derived parameters (plain JAX glue) ----
    b1c = params["b1"].reshape(N_QUBITS, 1)
    gnw = params["gn_w"].reshape(N_QUBITS, 1)
    gnb = params["gn_b"].reshape(N_QUBITS, 1)
    m_st = params["m"].T.reshape(N_FUZZY * N_QUBITS, 1)               # [mem0 f0..f2, mem1 f0..f2]
    th_st = params["theta"].T.reshape(N_FUZZY * N_QUBITS, 1)
    ninv = -1.0 / (2.0 * th_st * th_st)
    # parameter-shifted t-norm thetas (+/- pi/2 per qubit) as per-row half-angles
    tt = params["theta_tnorm"]
    shifts = []
    for i in range(N_QUBITS):
        e = jnp.zeros((N_QUBITS,), jnp.float32).at[i].set(HALF_PI)
        shifts += [tt + e, tt - e]
    shifts = jnp.stack(shifts, axis=0)                                # (6, 3): [shift k, feature j]
    tsh = jnp.concatenate([shifts.T, shifts.T], axis=0) * 0.5         # (6, 6): [mem*3+j, k]

    # ---- stage 1: fuzzy + quantum t-norm, batch tiled on lanes ----
    q_t = pl.pallas_call(
        qfnn_stage1_kernel,
        out_shape=jax.ShapeDtypeStruct((N_COMBO, bp), jnp.float32),
        grid=grid,
        in_specs=[
            pl.BlockSpec((D_IN, tb), lambda i: (0, i)),
            _param_spec((N_QUBITS, D_IN)),
            _param_spec((N_QUBITS, 1)),
            _param_spec((N_QUBITS, 1)),
            _param_spec((N_QUBITS, 1)),
            _param_spec((N_FUZZY * N_QUBITS, 1)),
            _param_spec((N_FUZZY * N_QUBITS, 1)),
            _param_spec((N_FUZZY * N_QUBITS, 2 * N_QUBITS)),
        ],
        out_specs=pl.BlockSpec((N_COMBO, tb), lambda i: (0, i)),
        compiler_params=pltpu.CompilerParams(dimension_semantics=("parallel",)),
    )(xT, params["w1"], b1c, gnw, gnb, m_st, ninv, tsh)

    # ---- BatchNorm1d(8) training-mode stats over the *valid* batch columns,
    #      folded into an effective softmax_linear weight / bias ----
    q_valid = q_t[:, :B]
    bmu = jnp.mean(q_valid, axis=1, keepdims=True)
    bvar = jnp.mean((q_valid - bmu) ** 2, axis=1, keepdims=True)      # biased variance
    scale = params["bn_g"].reshape(N_COMBO, 1) * jax.lax.rsqrt(bvar + EPS_BN)
    shift = params["bn_b"].reshape(N_COMBO, 1) - bmu * scale
    w2_eff = params["w2"] * scale.reshape(1, N_COMBO)                 # (10, 8)
    b2_eff = params["b2"].reshape(D_OUT, 1) + params["w2"] @ shift    # (10, 1)

    # ---- stage 2: fused BN-affine + softmax_linear(8 -> 10) ----
    logits_t = pl.pallas_call(
        qfnn_stage2_kernel,
        out_shape=jax.ShapeDtypeStruct((D_OUT, bp), jnp.float32),
        grid=grid,
        in_specs=[
            pl.BlockSpec((N_COMBO, tb), lambda i: (0, i)),
            _param_spec((D_OUT, N_COMBO)),
            _param_spec((D_OUT, 1)),
        ],
        out_specs=pl.BlockSpec((D_OUT, tb), lambda i: (0, i)),
        compiler_params=pltpu.CompilerParams(dimension_semantics=("parallel",)),
    )(q_t, w2_eff, b2_eff)
    logits = logits_t[:, :B].T                                        # (B, 10)

    # ---- LearnableDefuzz: ignores its input values; fixed 3-vector per row ----
    out = jnp.broadcast_to(
        _defuzz_vector(params["theta_defuzz"]).reshape(1, N_QUBITS), (B, N_QUBITS))
    return out, logits


def qfnn_reference(x, params):
    """Pure-JAX reference of the PyTorch forward (verification only)."""
    x = x.astype(jnp.float32)
    B = x.shape[0]
    h = x @ params["w1"].T + params["b1"]
    mu = jnp.mean(h, axis=1, keepdims=True)
    var = jnp.mean((h - mu) ** 2, axis=1, keepdims=True)
    hg = (h - mu) / jnp.sqrt(var + EPS_GN) * params["gn_w"] + params["gn_b"]

    m, th = params["m"], params["theta"]
    fz = jnp.exp(-(hg[:, :, None] - m[None]) ** 2 / (2.0 * th[None] ** 2))   # (B,3,2)

    tt = params["theta_tnorm"]
    shifts = []
    for i in range(N_QUBITS):
        e = jnp.zeros((N_QUBITS,), jnp.float32).at[i].set(HALF_PI)
        shifts += [tt + e, tt - e]
    shifts = jnp.stack(shifts, axis=0)                                       # (6,3)

    q_cols = []
    for i in range(N_COMBO):
        bits = [(i >> (N_QUBITS - 1 - j)) & 1 for j in range(N_QUBITS)]
        q_in = jnp.stack([fz[:, j, bits[j]] for j in range(N_QUBITS)], axis=1)
        ang = 2.0 * jnp.arcsin(jnp.clip(jnp.sqrt(q_in + 1e-16), -0.99999, 0.99999))
        p = jnp.sin(0.5 * shifts[None] * ang[:, None, :]) ** 2               # (B,6,3)
        prob = p[:, :, 0] * (1.0 - p[:, :, 1]) * (1.0 - p[:, :, 2])
        q_cols.append(jnp.mean(prob, axis=1))
    q = jnp.stack(q_cols, axis=1)                                            # (B,8)

    bmu = jnp.mean(q, axis=0, keepdims=True)
    bvar = jnp.mean((q - bmu) ** 2, axis=0, keepdims=True)
    q_bn = (q - bmu) / jnp.sqrt(bvar + EPS_BN) * params["bn_g"] + params["bn_b"]
    logits = q_bn @ params["w2"].T + params["b2"]
    out = jnp.broadcast_to(_defuzz_vector(params["theta_defuzz"])[None, :], (B, N_QUBITS))
    return out, logits


if __name__ == "__main__":
    key = jax.random.PRNGKey(0)
    k_x, k_p, k_x2 = jax.random.split(key, 3)
    params = init_params(k_p)

    # Small batch (single tile, padded to 128 lanes).
    B = 8
    x = jax.random.normal(k_x, (B, D_IN), dtype=jnp.float32)
    out, logits = jax.jit(qfnn_forward)(x, params)
    jax.block_until_ready((out, logits))
    assert out.shape == (B, N_QUBITS) and logits.shape == (B, D_OUT)
    assert bool(jnp.all(jnp.isfinite(out))) and bool(jnp.all(jnp.isfinite(logits)))
    ref_out, ref_logits = qfnn_reference(x, params)
    assert bool(jnp.allclose(out, ref_out, atol=1e-5, rtol=1e-5))
    assert bool(jnp.allclose(logits, ref_logits, atol=5e-3, rtol=5e-3))

    # Multi-tile path (grid > 1, non-multiple-of-128 batch -> padded columns
    # must be excluded from the BatchNorm statistics).
    B2 = 260
    x2 = jax.random.normal(k_x2, (B2, D_IN), dtype=jnp.float32)
    out2, logits2 = jax.jit(lambda a, p: qfnn_forward(a, p, block_b=128))(x2, params)
    jax.block_until_ready((out2, logits2))
    ref_out2, ref_logits2 = qfnn_reference(x2, params)
    assert bool(jnp.allclose(out2, ref_out2, atol=1e-5, rtol=1e-5))
    assert bool(jnp.allclose(logits2, ref_logits2, atol=5e-3, rtol=5e-3))

    print("KERNEL_OK")
</pallas_src>

<mosaic_0001>
module attributes {stable_mosaic.version = 11 : i64} {
  func.func @qfnn_stage1_kernel(%arg0: i32, %arg1: memref<10x128xf32, #tpu.memory_space<vmem>>, %arg2: memref<3x10xf32, #tpu.memory_space<vmem>>, %arg3: memref<3x1xf32, #tpu.memory_space<vmem>>, %arg4: memref<3x1xf32, #tpu.memory_space<vmem>>, %arg5: memref<3x1xf32, #tpu.memory_space<vmem>>, %arg6: memref<6x1xf32, #tpu.memory_space<vmem>>, %arg7: memref<6x1xf32, #tpu.memory_space<vmem>>, %arg8: memref<6x6xf32, #tpu.memory_space<vmem>>, %arg9: memref<8x128xf32, #tpu.memory_space<vmem>>) attributes {dimension_semantics = [#tpu.dimension_semantics<parallel>], iteration_bounds = array<i64: 1>, scalar_prefetch = 0 : i64, scratch_operands = 0 : i64, tpu.core_type = #tpu.core_type<tc>, window_params = [{transform_indices = @transform_0, window_bounds = array<i64: 10, 128>}, {pipeline_mode = #tpu.pipeline_mode<synchronous>, transform_indices = @transform_1, window_bounds = array<i64: 3, 10>}, {pipeline_mode = #tpu.pipeline_mode<synchronous>, transform_indices = @transform_2, window_bounds = array<i64: 3, 1>}, {pipeline_mode = #tpu.pipeline_mode<synchronous>, transform_indices = @transform_3, window_bounds = array<i64: 3, 1>}, {pipeline_mode = #tpu.pipeline_mode<synchronous>, transform_indices = @transform_4, window_bounds = array<i64: 3, 1>}, {pipeline_mode = #tpu.pipeline_mode<synchronous>, transform_indices = @transform_5, window_bounds = array<i64: 6, 1>}, {pipeline_mode = #tpu.pipeline_mode<synchronous>, transform_indices = @transform_6, window_bounds = array<i64: 6, 1>}, {pipeline_mode = #tpu.pipeline_mode<synchronous>, transform_indices = @transform_7, window_bounds = array<i64: 6, 6>}, {transform_indices = @transform_8, window_bounds = array<i64: 8, 128>}]} {
    %c0 = arith.constant 0 : index
    %c0_0 = arith.constant 0 : index
    %0 = vector.load %arg1[%c0, %c0_0] : memref<10x128xf32, #tpu.memory_space<vmem>>, vector<10x128xf32>
    %c0_1 = arith.constant 0 : index
    %c0_2 = arith.constant 0 : index
    %1 = vector.load %arg2[%c0_1, %c0_2] : memref<3x10xf32, #tpu.memory_space<vmem>>, vector<3x10xf32>
    %cst = arith.constant dense<0.000000e+00> : vector<3x128xf32>
    %2 = tpu.matmul %1, %0, %cst {dimension_numbers = #tpu.dot_dimension_numbers<[1], [0], [0], [1], [0, 0, 1, 1], [], []>} : vector<3x10xf32>, vector<10x128xf32>, vector<3x128xf32> -> vector<3x128xf32>
    %c0_3 = arith.constant 0 : index
    %c0_4 = arith.constant 0 : index
    %3 = vector.load %arg3[%c0_3, %c0_4] : memref<3x1xf32, #tpu.memory_space<vmem>>, vector<3x1xf32>
    %4 = vector.broadcast %3 : vector<3x1xf32> to vector<3x128xf32>
    %5 = arith.addf %2, %4 : vector<3x128xf32>
    %6 = vector.extract_strided_slice %5 {offsets = [0, 0], sizes = [1, 128], strides = [1, 1]} : vector<3x128xf32> to vector<1x128xf32>
    %7 = vector.extract_strided_slice %5 {offsets = [1, 0], sizes = [1, 128], strides = [1, 1]} : vector<3x128xf32> to vector<1x128xf32>
    %8 = arith.addf %6, %7 : vector<1x128xf32>
    %9 = vector.extract_strided_slice %5 {offsets = [2, 0], sizes = [1, 128], strides = [1, 1]} : vector<3x128xf32> to vector<1x128xf32>
    %10 = arith.addf %8, %9 : vector<1x128xf32>
    %cst_5 = arith.constant 0.333333343 : f32
    %11 = vector.broadcast %cst_5 : f32 to vector<1x128xf32>
    %12 = arith.mulf %10, %11 : vector<1x128xf32>
    %13 = vector.broadcast %12 : vector<1x128xf32> to vector<3x128xf32>
    %14 = arith.subf %5, %13 : vector<3x128xf32>
    %15 = arith.mulf %14, %14 : vector<3x128xf32>
    %16 = vector.extract_strided_slice %15 {offsets = [0, 0], sizes = [1, 128], strides = [1, 1]} : vector<3x128xf32> to vector<1x128xf32>
    %17 = vector.extract_strided_slice %15 {offsets = [1, 0], sizes = [1, 128], strides = [1, 1]} : vector<3x128xf32> to vector<1x128xf32>
    %18 = arith.addf %16, %17 : vector<1x128xf32>
    %19 = vector.extract_strided_slice %15 {offsets = [2, 0], sizes = [1, 128], strides = [1, 1]} : vector<3x128xf32> to vector<1x128xf32>
    %20 = arith.addf %18, %19 : vector<1x128xf32>
    %cst_6 = arith.constant 0.333333343 : f32
    %21 = vector.broadcast %cst_6 : f32 to vector<1x128xf32>
    %22 = arith.mulf %20, %21 : vector<1x128xf32>
    %cst_7 = arith.constant 9.99999974E-6 : f32
    %23 = vector.broadcast %cst_7 : f32 to vector<1x128xf32>
    %24 = arith.addf %22, %23 : vector<1x128xf32>
    %25 = math.rsqrt %24 : vector<1x128xf32>
    %26 = vector.broadcast %25 : vector<1x128xf32> to vector<3x128xf32>
    %27 = arith.mulf %14, %26 : vector<3x128xf32>
    %c0_8 = arith.constant 0 : index
    %c0_9 = arith.constant 0 : index
    %28 = vector.load %arg4[%c0_8, %c0_9] : memref<3x1xf32, #tpu.memory_space<vmem>>, vector<3x1xf32>
    %29 = vector.broadcast %28 : vector<3x1xf32> to vector<3x128xf32>
    %30 = arith.mulf %27, %29 : vector<3x128xf32>
    %c0_10 = arith.constant 0 : index
    %c0_11 = arith.constant 0 : index
    %31 = vector.load %arg5[%c0_10, %c0_11] : memref<3x1xf32, #tpu.memory_space<vmem>>, vector<3x1xf32>
    %32 = vector.broadcast %31 : vector<3x1xf32> to vector<3x128xf32>
    %33 = arith.addf %30, %32 : vector<3x128xf32>
    %34 = tpu.concatenate %33, %33 in 0 : vector<3x128xf32>, vector<3x128xf32> -> vector<6x128xf32>
    %c0_12 = arith.constant 0 : index
    %c0_13 = arith.constant 0 : index
    %35 = vector.load %arg6[%c0_12, %c0_13] : memref<6x1xf32, #tpu.memory_space<vmem>>, vector<6x1xf32>
    %36 = vector.broadcast %35 : vector<6x1xf32> to vector<6x128xf32>
    %37 = arith.subf %34, %36 : vector<6x128xf32>
    %38 = arith.mulf %37, %37 : vector<6x128xf32>
    %c0_14 = arith.constant 0 : index
    %c0_15 = arith.constant 0 : index
    %39 = vector.load %arg7[%c0_14, %c0_15] : memref<6x1xf32, #tpu.memory_space<vmem>>, vector<6x1xf32>
    %40 = vector.broadcast %39 : vector<6x1xf32> to vector<6x128xf32>
    %41 = arith.mulf %38, %40 : vector<6x128xf32>
    %42 = math.exp %41 : vector<6x128xf32>
    %cst_16 = arith.constant 1.000000e-16 : f32
    %43 = vector.broadcast %cst_16 : f32 to vector<6x128xf32>
    %44 = arith.addf %42, %43 : vector<6x128xf32>
    %45 = math.sqrt %44 : vector<6x128xf32>
    %cst_17 = arith.constant 0.999989986 : f32
    %46 = vector.broadcast %cst_17 : f32 to vector<6x128xf32>
    %47 = arith.minimumf %45, %46 : vector<6x128xf32>
    %cst_18 = arith.constant 1.000000e+00 : f32
    %48 = vector.broadcast %cst_18 : f32 to vector<6x128xf32>
    %49 = arith.subf %48, %47 : vector<6x128xf32>
    %50 = math.sqrt %49 : vector<6x128xf32>
    %cst_19 = arith.constant -1.872930e-02 : f32
    %51 = vector.broadcast %cst_19 : f32 to vector<6x128xf32>
    %52 = arith.mulf %47, %51 : vector<6x128xf32>
    %cst_20 = arith.constant 7.426100e-02 : f32
    %53 = vector.broadcast %cst_20 : f32 to vector<6x128xf32>
    %54 = arith.addf %53, %52 : vector<6x128xf32>
    %55 = arith.mulf %47, %54 : vector<6x128xf32>
    %cst_21 = arith.constant -0.212114394 : f32
    %56 = vector.broadcast %cst_21 : f32 to vector<6x128xf32>
    %57 = arith.addf %56, %55 : vector<6x128xf32>
    %58 = arith.mulf %47, %57 : vector<6x128xf32>
    %cst_22 = arith.constant 1.57072878 : f32
    %59 = vector.broadcast %cst_22 : f32 to vector<6x128xf32>
    %60 = arith.addf %59, %58 : vector<6x128xf32>
    %61 = arith.mulf %50, %60 : vector<6x128xf32>
    %cst_23 = arith.constant 1.57079637 : f32
    %62 = vector.broadcast %cst_23 : f32 to vector<6x128xf32>
    %63 = arith.subf %62, %61 : vector<6x128xf32>
    %64 = math.sin %63 : vector<6x128xf32>
    %65 = arith.subf %64, %47 : vector<6x128xf32>
    %66 = math.cos %63 : vector<6x128xf32>
    %67 = arith.divf %65, %66 : vector<6x128xf32>
    %68 = arith.subf %63, %67 : vector<6x128xf32>
    %cst_24 = arith.constant 2.000000e+00 : f32
    %69 = vector.broadcast %cst_24 : f32 to vector<6x128xf32>
    %70 = arith.mulf %69, %68 : vector<6x128xf32>
    %c0_25 = arith.constant 0 : index
    %c0_26 = arith.constant 0 : index
    %71 = vector.load %arg8[%c0_25, %c0_26] : memref<6x6xf32, #tpu.memory_space<vmem>>, vector<6x6xf32>
    %cst_27 = arith.constant 0.000000e+00 : f32
    %72 = vector.broadcast %cst_27 : f32 to vector<1x128xf32>
    %cst_28 = arith.constant 0.000000e+00 : f32
    %73 = vector.broadcast %cst_28 : f32 to vector<1x128xf32>
    %cst_29 = arith.constant 0.000000e+00 : f32
    %74 = vector.broadcast %cst_29 : f32 to vector<1x128xf32>
    %cst_30 = arith.constant 0.000000e+00 : f32
    %75 = vector.broadcast %cst_30 : f32 to vector<1x128xf32>
    %cst_31 = arith.constant 0.000000e+00 : f32
    %76 = vector.broadcast %cst_31 : f32 to vector<1x128xf32>
    %cst_32 = arith.constant 0.000000e+00 : f32
    %77 = vector.broadcast %cst_32 : f32 to vector<1x128xf32>
    %cst_33 = arith.constant 0.000000e+00 : f32
    %78 = vector.broadcast %cst_33 : f32 to vector<1x128xf32>
    %cst_34 = arith.constant 0.000000e+00 : f32
    %79 = vector.broadcast %cst_34 : f32 to vector<1x128xf32>
    %80 = vector.extract_strided_slice %71 {offsets = [0, 0], sizes = [6, 1], strides = [1, 1]} : vector<6x6xf32> to vector<6x1xf32>
    %81 = vector.broadcast %80 : vector<6x1xf32> to vector<6x128xf32>
    %82 = arith.mulf %70, %81 : vector<6x128xf32>
    %83 = math.sin %82 : vector<6x128xf32>
    %84 = arith.mulf %83, %83 : vector<6x128xf32>
    %85 = vector.extract_strided_slice %84 {offsets = [0, 0], sizes = [1, 128], strides = [1, 1]} : vector<6x128xf32> to vector<1x128xf32>
    %86 = vector.extract_strided_slice %84 {offsets = [3, 0], sizes = [1, 128], strides = [1, 1]} : vector<6x128xf32> to vector<1x128xf32>
    %87 = vector.extract_strided_slice %84 {offsets = [1, 0], sizes = [1, 128], strides = [1, 1]} : vector<6x128xf32> to vector<1x128xf32>
    %cst_35 = arith.constant 1.000000e+00 : f32
    %88 = vector.broadcast %cst_35 : f32 to vector<1x128xf32>
    %89 = arith.subf %88, %87 : vector<1x128xf32>
    %90 = vector.extract_strided_slice %84 {offsets = [4, 0], sizes = [1, 128], strides = [1, 1]} : vector<6x128xf32> to vector<1x128xf32>
    %cst_36 = arith.constant 1.000000e+00 : f32
    %91 = vector.broadcast %cst_36 : f32 to vector<1x128xf32>
    %92 = arith.subf %91, %90 : vector<1x128xf32>
    %93 = vector.extract_strided_slice %84 {offsets = [2, 0], sizes = [1, 128], strides = [1, 1]} : vector<6x128xf32> to vector<1x128xf32>
    %cst_37 = arith.constant 1.000000e+00 : f32
    %94 = vector.broadcast %cst_37 : f32 to vector<1x128xf32>
    %95 = arith.subf %94, %93 : vector<1x128xf32>
    %96 = vector.extract_strided_slice %84 {offsets = [5, 0], sizes = [1, 128], strides = [1, 1]} : vector<6x128xf32> to vector<1x128xf32>
    %cst_38 = arith.constant 1.000000e+00 : f32
    %97 = vector.broadcast %cst_38 : f32 to vector<1x128xf32>
    %98 = arith.subf %97, %96 : vector<1x128xf32>
    %99 = arith.mulf %89, %95 : vector<1x128xf32>
    %100 = arith.mulf %89, %98 : vector<1x128xf32>
    %101 = arith.mulf %92, %95 : vector<1x128xf32>
    %102 = arith.mulf %92, %98 : vector<1x128xf32>
    %103 = arith.mulf %85, %99 : vector<1x128xf32>
    %104 = arith.addf %72, %103 : vector<1x128xf32>
    %105 = arith.mulf %85, %100 : vector<1x128xf32>
    %106 = arith.addf %73, %105 : vector<1x128xf32>
    %107 = arith.mulf %85, %101 : vector<1x128xf32>
    %108 = arith.addf %74, %107 : vector<1x128xf32>
    %109 = arith.mulf %85, %102 : vector<1x128xf32>
    %110 = arith.addf %75, %109 : vector<1x128xf32>
    %111 = arith.mulf %86, %99 : vector<1x128xf32>
    %112 = arith.addf %76, %111 : vector<1x128xf32>
    %113 = arith.mulf %86, %100 : vector<1x128xf32>
    %114 = arith.addf %77, %113 : vector<1x128xf32>
    %115 = arith.mulf %86, %101 : vector<1x128xf32>
    %116 = arith.addf %78, %115 : vector<1x128xf32>
    %117 = arith.mulf %86, %102 : vector<1x128xf32>
    %118 = arith.addf %79, %117 : vector<1x128xf32>
    %119 = vector.extract_strided_slice %71 {offsets = [0, 1], sizes = [6, 1], strides = [1, 1]} : vector<6x6xf32> to vector<6x1xf32>
    %120 = vector.broadcast %119 : vector<6x1xf32> to vector<6x128xf32>
    %121 = arith.mulf %70, %120 : vector<6x128xf32>
    %122 = math.sin %121 : vector<6x128xf32>
    %123 = arith.mulf %122, %122 : vector<6x128xf32>
    %124 = vector.extract_strided_slice %123 {offsets = [0, 0], sizes = [1, 128], strides = [1, 1]} : vector<6x128xf32> to vector<1x128xf32>
    %125 = vector.extract_strided_slice %123 {offsets = [3, 0], sizes = [1, 128], strides = [1, 1]} : vector<6x128xf32> to vector<1x128xf32>
    %126 = vector.extract_strided_slice %123 {offsets = [1, 0], sizes = [1, 128], strides = [1, 1]} : vector<6x128xf32> to vector<1x128xf32>
    %cst_39 = arith.constant 1.000000e+00 : f32
    %127 = vector.broadcast %cst_39 : f32 to vector<1x128xf32>
    %128 = arith.subf %127, %126 : vector<1x128xf32>
    %129 = vector.extract_strided_slice %123 {offsets = [4, 0], sizes = [1, 128], strides = [1, 1]} : vector<6x128xf32> to vector<1x128xf32>
    %cst_40 = arith.constant 1.000000e+00 : f32
    %130 = vector.broadcast %cst_40 : f32 to vector<1x128xf32>
    %131 = arith.subf %130, %129 : vector<1x128xf32>
    %132 = vector.extract_strided_slice %123 {offsets = [2, 0], sizes = [1, 128], strides = [1, 1]} : vector<6x128xf32> to vector<1x128xf32>
    %cst_41 = arith.constant 1.000000e+00 : f32
    %133 = vector.broadcast %cst_41 : f32 to vector<1x128xf32>
    %134 = arith.subf %133, %132 : vector<1x128xf32>
    %135 = vector.extract_strided_slice %123 {offsets = [5, 0], sizes = [1, 128], strides = [1, 1]} : vector<6x128xf32> to vector<1x128xf32>
    %cst_42 = arith.constant 1.000000e+00 : f32
    %136 = vector.broadcast %cst_42 : f32 to vector<1x128xf32>
    %137 = arith.subf %136, %135 : vector<1x128xf32>
    %138 = arith.mulf %128, %134 : vector<1x128xf32>
    %139 = arith.mulf %128, %137 : vector<1x128xf32>
    %140 = arith.mulf %131, %134 : vector<1x128xf32>
    %141 = arith.mulf %131, %137 : vector<1x128xf32>
    %142 = arith.mulf %124, %138 : vector<1x128xf32>
    %143 = arith.addf %104, %142 : vector<1x128xf32>
    %144 = arith.mulf %124, %139 : vector<1x128xf32>
    %145 = arith.addf %106, %144 : vector<1x128xf32>
    %146 = arith.mulf %124, %140 : vector<1x128xf32>
    %147 = arith.addf %108, %146 : vector<1x128xf32>
    %148 = arith.mulf %124, %141 : vector<1x128xf32>
    %149 = arith.addf %110, %148 : vector<1x128xf32>
    %150 = arith.mulf %125, %138 : vector<1x128xf32>
    %151 = arith.addf %112, %150 : vector<1x128xf32>
    %152 = arith.mulf %125, %139 : vector<1x128xf32>
    %153 = arith.addf %114, %152 : vector<1x128xf32>
    %154 = arith.mulf %125, %140 : vector<1x128xf32>
    %155 = arith.addf %116, %154 : vector<1x128xf32>
    %156 = arith.mulf %125, %141 : vector<1x128xf32>
    %157 = arith.addf %118, %156 : vector<1x128xf32>
    %158 = vector.extract_strided_slice %71 {offsets = [0, 2], sizes = [6, 1], strides = [1, 1]} : vector<6x6xf32> to vector<6x1xf32>
    %159 = vector.broadcast %158 : vector<6x1xf32> to vector<6x128xf32>
    %160 = arith.mulf %70, %159 : vector<6x128xf32>
    %161 = math.sin %160 : vector<6x128xf32>
    %162 = arith.mulf %161, %161 : vector<6x128xf32>
    %163 = vector.extract_strided_slice %162 {offsets = [0, 0], sizes = [1, 128], strides = [1, 1]} : vector<6x128xf32> to vector<1x128xf32>
    %164 = vector.extract_strided_slice %162 {offsets = [3, 0], sizes = [1, 128], strides = [1, 1]} : vector<6x128xf32> to vector<1x128xf32>
    %165 = vector.extract_strided_slice %162 {offsets = [1, 0], sizes = [1, 128], strides = [1, 1]} : vector<6x128xf32> to vector<1x128xf32>
    %cst_43 = arith.constant 1.000000e+00 : f32
    %166 = vector.broadcast %cst_43 : f32 to vector<1x128xf32>
    %167 = arith.subf %166, %165 : vector<1x128xf32>
    %168 = vector.extract_strided_slice %162 {offsets = [4, 0], sizes = [1, 128], strides = [1, 1]} : vector<6x128xf32> to vector<1x128xf32>
    %cst_44 = arith.constant 1.000000e+00 : f32
    %169 = vector.broadcast %cst_44 : f32 to vector<1x128xf32>
    %170 = arith.subf %169, %168 : vector<1x128xf32>
    %171 = vector.extract_strided_slice %162 {offsets = [2, 0], sizes = [1, 128], strides = [1, 1]} : vector<6x128xf32> to vector<1x128xf32>
    %cst_45 = arith.constant 1.000000e+00 : f32
    %172 = vector.broadcast %cst_45 : f32 to vector<1x128xf32>
    %173 = arith.subf %172, %171 : vector<1x128xf32>
    %174 = vector.extract_strided_slice %162 {offsets = [5, 0], sizes = [1, 128], strides = [1, 1]} : vector<6x128xf32> to vector<1x128xf32>
    %cst_46 = arith.constant 1.000000e+00 : f32
    %175 = vector.broadcast %cst_46 : f32 to vector<1x128xf32>
    %176 = arith.subf %175, %174 : vector<1x128xf32>
    %177 = arith.mulf %167, %173 : vector<1x128xf32>
    %178 = arith.mulf %167, %176 : vector<1x128xf32>
    %179 = arith.mulf %170, %173 : vector<1x128xf32>
    %180 = arith.mulf %170, %176 : vector<1x128xf32>
    %181 = arith.mulf %163, %177 : vector<1x128xf32>
    %182 = arith.addf %143, %181 : vector<1x128xf32>
    %183 = arith.mulf %163, %178 : vector<1x128xf32>
    %184 = arith.addf %145, %183 : vector<1x128xf32>
    %185 = arith.mulf %163, %179 : vector<1x128xf32>
    %186 = arith.addf %147, %185 : vector<1x128xf32>
    %187 = arith.mulf %163, %180 : vector<1x128xf32>
    %188 = arith.addf %149, %187 : vector<1x128xf32>
    %189 = arith.mulf %164, %177 : vector<1x128xf32>
    %190 = arith.addf %151, %189 : vector<1x128xf32>
    %191 = arith.mulf %164, %178 : vector<1x128xf32>
    %192 = arith.addf %153, %191 : vector<1x128xf32>
    %193 = arith.mulf %164, %179 : vector<1x128xf32>
    %194 = arith.addf %155, %193 : vector<1x128xf32>
    %195 = arith.mulf %164, %180 : vector<1x128xf32>
    %196 = arith.addf %157, %195 : vector<1x128xf32>
    %197 = vector.extract_strided_slice %71 {offsets = [0, 3], sizes = [6, 1], strides = [1, 1]} : vector<6x6xf32> to vector<6x1xf32>
    %198 = vector.broadcast %197 : vector<6x1xf32> to vector<6x128xf32>
    %199 = arith.mulf %70, %198 : vector<6x128xf32>
    %200 = math.sin %199 : vector<6x128xf32>
    %201 = arith.mulf %200, %200 : vector<6x128xf32>
    %202 = vector.extract_strided_slice %201 {offsets = [0, 0], sizes = [1, 128], strides = [1, 1]} : vector<6x128xf32> to vector<1x128xf32>
    %203 = vector.extract_strided_slice %201 {offsets = [3, 0], sizes = [1, 128], strides = [1, 1]} : vector<6x128xf32> to vector<1x128xf32>
    %204 = vector.extract_strided_slice %201 {offsets = [1, 0], sizes = [1, 128], strides = [1, 1]} : vector<6x128xf32> to vector<1x128xf32>
    %cst_47 = arith.constant 1.000000e+00 : f32
    %205 = vector.broadcast %cst_47 : f32 to vector<1x128xf32>
    %206 = arith.subf %205, %204 : vector<1x128xf32>
    %207 = vector.extract_strided_slice %201 {offsets = [4, 0], sizes = [1, 128], strides = [1, 1]} : vector<6x128xf32> to vector<1x128xf32>
    %cst_48 = arith.constant 1.000000e+00 : f32
    %208 = vector.broadcast %cst_48 : f32 to vector<1x128xf32>
    %209 = arith.subf %208, %207 : vector<1x128xf32>
    %210 = vector.extract_strided_slice %201 {offsets = [2, 0], sizes = [1, 128], strides = [1, 1]} : vector<6x128xf32> to vector<1x128xf32>
    %cst_49 = arith.constant 1.000000e+00 : f32
    %211 = vector.broadcast %cst_49 : f32 to vector<1x128xf32>
    %212 = arith.subf %211, %210 : vector<1x128xf32>
    %213 = vector.extract_strided_slice %201 {offsets = [5, 0], sizes = [1, 128], strides = [1, 1]} : vector<6x128xf32> to vector<1x128xf32>
    %cst_50 = arith.constant 1.000000e+00 : f32
    %214 = vector.broadcast %cst_50 : f32 to vector<1x128xf32>
    %215 = arith.subf %214, %213 : vector<1x128xf32>
    %216 = arith.mulf %206, %212 : vector<1x128xf32>
    %217 = arith.mulf %206, %215 : vector<1x128xf32>
    %218 = arith.mulf %209, %212 : vector<1x128xf32>
    %219 = arith.mulf %209, %215 : vector<1x128xf32>
    %220 = arith.mulf %202, %216 : vector<1x128xf32>
    %221 = arith.addf %182, %220 : vector<1x128xf32>
    %222 = arith.mulf %202, %217 : vector<1x128xf32>
    %223 = arith.addf %184, %222 : vector<1x128xf32>
    %224 = arith.mulf %202, %218 : vector<1x128xf32>
    %225 = arith.addf %186, %224 : vector<1x128xf32>
    %226 = arith.mulf %202, %219 : vector<1x128xf32>
    %227 = arith.addf %188, %226 : vector<1x128xf32>
    %228 = arith.mulf %203, %216 : vector<1x128xf32>
    %229 = arith.addf %190, %228 : vector<1x128xf32>
    %230 = arith.mulf %203, %217 : vector<1x128xf32>
    %231 = arith.addf %192, %230 : vector<1x128xf32>
    %232 = arith.mulf %203, %218 : vector<1x128xf32>
    %233 = arith.addf %194, %232 : vector<1x128xf32>
    %234 = arith.mulf %203, %219 : vector<1x128xf32>
    %235 = arith.addf %196, %234 : vector<1x128xf32>
    %236 = vector.extract_strided_slice %71 {offsets = [0, 4], sizes = [6, 1], strides = [1, 1]} : vector<6x6xf32> to vector<6x1xf32>
    %237 = vector.broadcast %236 : vector<6x1xf32> to vector<6x128xf32>
    %238 = arith.mulf %70, %237 : vector<6x128xf32>
    %239 = math.sin %238 : vector<6x128xf32>
    %240 = arith.mulf %239, %239 : vector<6x128xf32>
    %241 = vector.extract_strided_slice %240 {offsets = [0, 0], sizes = [1, 128], strides = [1, 1]} : vector<6x128xf32> to vector<1x128xf32>
    %242 = vector.extract_strided_slice %240 {offsets = [3, 0], sizes = [1, 128], strides = [1, 1]} : vector<6x128xf32> to vector<1x128xf32>
    %243 = vector.extract_strided_slice %240 {offsets = [1, 0], sizes = [1, 128], strides = [1, 1]} : vector<6x128xf32> to vector<1x128xf32>
    %cst_51 = arith.constant 1.000000e+00 : f32
    %244 = vector.broadcast %cst_51 : f32 to vector<1x128xf32>
    %245 = arith.subf %244, %243 : vector<1x128xf32>
    %246 = vector.extract_strided_slice %240 {offsets = [4, 0], sizes = [1, 128], strides = [1, 1]} : vector<6x128xf32> to vector<1x128xf32>
    %cst_52 = arith.constant 1.000000e+00 : f32
    %247 = vector.broadcast %cst_52 : f32 to vector<1x128xf32>
    %248 = arith.subf %247, %246 : vector<1x128xf32>
    %249 = vector.extract_strided_slice %240 {offsets = [2, 0], sizes = [1, 128], strides = [1, 1]} : vector<6x128xf32> to vector<1x128xf32>
    %cst_53 = arith.constant 1.000000e+00 : f32
    %250 = vector.broadcast %cst_53 : f32 to vector<1x128xf32>
    %251 = arith.subf %250, %249 : vector<1x128xf32>
    %252 = vector.extract_strided_slice %240 {offsets = [5, 0], sizes = [1, 128], strides = [1, 1]} : vector<6x128xf32> to vector<1x128xf32>
    %cst_54 = arith.constant 1.000000e+00 : f32
    %253 = vector.broadcast %cst_54 : f32 to vector<1x128xf32>
    %254 = arith.subf %253, %252 : vector<1x128xf32>
    %255 = arith.mulf %245, %251 : vector<1x128xf32>
    %256 = arith.mulf %245, %254 : vector<1x128xf32>
    %257 = arith.mulf %248, %251 : vector<1x128xf32>
    %258 = arith.mulf %248, %254 : vector<1x128xf32>
    %259 = arith.mulf %241, %255 : vector<1x128xf32>
    %260 = arith.addf %221, %259 : vector<1x128xf32>
    %261 = arith.mulf %241, %256 : vector<1x128xf32>
    %262 = arith.addf %223, %261 : vector<1x128xf32>
    %263 = arith.mulf %241, %257 : vector<1x128xf32>
    %264 = arith.addf %225, %263 : vector<1x128xf32>
    %265 = arith.mulf %241, %258 : vector<1x128xf32>
    %266 = arith.addf %227, %265 : vector<1x128xf32>
    %267 = arith.mulf %242, %255 : vector<1x128xf32>
    %268 = arith.addf %229, %267 : vector<1x128xf32>
    %269 = arith.mulf %242, %256 : vector<1x128xf32>
    %270 = arith.addf %231, %269 : vector<1x128xf32>
    %271 = arith.mulf %242, %257 : vector<1x128xf32>
    %272 = arith.addf %233, %271 : vector<1x128xf32>
    %273 = arith.mulf %242, %258 : vector<1x128xf32>
    %274 = arith.addf %235, %273 : vector<1x128xf32>
    %275 = vector.extract_strided_slice %71 {offsets = [0, 5], sizes = [6, 1], strides = [1, 1]} : vector<6x6xf32> to vector<6x1xf32>
    %276 = vector.broadcast %275 : vector<6x1xf32> to vector<6x128xf32>
    %277 = arith.mulf %70, %276 : vector<6x128xf32>
    %278 = math.sin %277 : vector<6x128xf32>
    %279 = arith.mulf %278, %278 : vector<6x128xf32>
    %280 = vector.extract_strided_slice %279 {offsets = [0, 0], sizes = [1, 128], strides = [1, 1]} : vector<6x128xf32> to vector<1x128xf32>
    %281 = vector.extract_strided_slice %279 {offsets = [3, 0], sizes = [1, 128], strides = [1, 1]} : vector<6x128xf32> to vector<1x128xf32>
    %282 = vector.extract_strided_slice %279 {offsets = [1, 0], sizes = [1, 128], strides = [1, 1]} : vector<6x128xf32> to vector<1x128xf32>
    %cst_55 = arith.constant 1.000000e+00 : f32
    %283 = vector.broadcast %cst_55 : f32 to vector<1x128xf32>
    %284 = arith.subf %283, %282 : vector<1x128xf32>
    %285 = vector.extract_strided_slice %279 {offsets = [4, 0], sizes = [1, 128], strides = [1, 1]} : vector<6x128xf32> to vector<1x128xf32>
    %cst_56 = arith.constant 1.000000e+00 : f32
    %286 = vector.broadcast %cst_56 : f32 to vector<1x128xf32>
    %287 = arith.subf %286, %285 : vector<1x128xf32>
    %288 = vector.extract_strided_slice %279 {offsets = [2, 0], sizes = [1, 128], strides = [1, 1]} : vector<6x128xf32> to vector<1x128xf32>
    %cst_57 = arith.constant 1.000000e+00 : f32
    %289 = vector.broadcast %cst_57 : f32 to vector<1x128xf32>
    %290 = arith.subf %289, %288 : vector<1x128xf32>
    %291 = vector.extract_strided_slice %279 {offsets = [5, 0], sizes = [1, 128], strides = [1, 1]} : vector<6x128xf32> to vector<1x128xf32>
    %cst_58 = arith.constant 1.000000e+00 : f32
    %292 = vector.broadcast %cst_58 : f32 to vector<1x128xf32>
    %293 = arith.subf %292, %291 : vector<1x128xf32>
    %294 = arith.mulf %284, %290 : vector<1x128xf32>
    %295 = arith.mulf %284, %293 : vector<1x128xf32>
    %296 = arith.mulf %287, %290 : vector<1x128xf32>
    %297 = arith.mulf %287, %293 : vector<1x128xf32>
    %298 = arith.mulf %280, %294 : vector<1x128xf32>
    %299 = arith.addf %260, %298 : vector<1x128xf32>
    %300 = arith.mulf %280, %295 : vector<1x128xf32>
    %301 = arith.addf %262, %300 : vector<1x128xf32>
    %302 = arith.mulf %280, %296 : vector<1x128xf32>
    %303 = arith.addf %264, %302 : vector<1x128xf32>
    %304 = arith.mulf %280, %297 : vector<1x128xf32>
    %305 = arith.addf %266, %304 : vector<1x128xf32>
    %306 = arith.mulf %281, %294 : vector<1x128xf32>
    %307 = arith.addf %268, %306 : vector<1x128xf32>
    %308 = arith.mulf %281, %295 : vector<1x128xf32>
    %309 = arith.addf %270, %308 : vector<1x128xf32>
    %310 = arith.mulf %281, %296 : vector<1x128xf32>
    %311 = arith.addf %272, %310 : vector<1x128xf32>
    %312 = arith.mulf %281, %297 : vector<1x128xf32>
    %313 = arith.addf %274, %312 : vector<1x128xf32>
    %cst_59 = arith.constant 0.166666672 : f32
    %314 = vector.broadcast %cst_59 : f32 to vector<1x128xf32>
    %315 = arith.mulf %299, %314 : vector<1x128xf32>
    %cst_60 = arith.constant 0.166666672 : f32
    %316 = vector.broadcast %cst_60 : f32 to vector<1x128xf32>
    %317 = arith.mulf %301, %316 : vector<1x128xf32>
    %cst_61 = arith.constant 0.166666672 : f32
    %318 = vector.broadcast %cst_61 : f32 to vector<1x128xf32>
    %319 = arith.mulf %303, %318 : vector<1x128xf32>
    %cst_62 = arith.constant 0.166666672 : f32
    %320 = vector.broadcast %cst_62 : f32 to vector<1x128xf32>
    %321 = arith.mulf %305, %320 : vector<1x128xf32>
    %cst_63 = arith.constant 0.166666672 : f32
    %322 = vector.broadcast %cst_63 : f32 to vector<1x128xf32>
    %323 = arith.mulf %307, %322 : vector<1x128xf32>
    %cst_64 = arith.constant 0.166666672 : f32
    %324 = vector.broadcast %cst_64 : f32 to vector<1x128xf32>
    %325 = arith.mulf %309, %324 : vector<1x128xf32>
    %cst_65 = arith.constant 0.166666672 : f32
    %326 = vector.broadcast %cst_65 : f32 to vector<1x128xf32>
    %327 = arith.mulf %311, %326 : vector<1x128xf32>
    %cst_66 = arith.constant 0.166666672 : f32
    %328 = vector.broadcast %cst_66 : f32 to vector<1x128xf32>
    %329 = arith.mulf %313, %328 : vector<1x128xf32>
    %330 = tpu.concatenate %315, %317, %319, %321, %323, %325, %327, %329 in 0 : vector<1x128xf32>, vector<1x128xf32>, vector<1x128xf32>, vector<1x128xf32>, vector<1x128xf32>, vector<1x128xf32>, vector<1x128xf32>, vector<1x128xf32> -> vector<8x128xf32>
    %c0_67 = arith.constant 0 : index
    %c0_68 = arith.constant 0 : index
    %331 = vector.load %arg9[%c0_67, %c0_68] : memref<8x128xf32, #tpu.memory_space<vmem>>, vector<8x128xf32>
    tpu.vector_store %arg9[%c0_67, %c0_68], %330 {strides = array<i32>} : memref<8x128xf32, #tpu.memory_space<vmem>>, vector<8x128xf32>,
    return
  }
  func.func @transform_0(%arg0: i32) -> (i32, i32) {
    %c0_i32 = arith.constant 0 : i32
    %c0_i32_0 = arith.constant 0 : i32
    return %c0_i32, %arg0 : i32, i32
  }
  func.func @transform_1(%arg0: i32) -> (i32, i32) {
    %c0_i32 = arith.constant 0 : i32
    %c0_i32_0 = arith.constant 0 : i32
    %c0_i32_1 = arith.constant 0 : i32
    return %c0_i32, %c0_i32_0 : i32, i32
  }
  func.func @transform_2(%arg0: i32) -> (i32, i32) {
    %c0_i32 = arith.constant 0 : i32
    %c0_i32_0 = arith.constant 0 : i32
    %c0_i32_1 = arith.constant 0 : i32
    return %c0_i32, %c0_i32_0 : i32, i32
  }
  func.func @transform_3(%arg0: i32) -> (i32, i32) {
    %c0_i32 = arith.constant 0 : i32
    %c0_i32_0 = arith.constant 0 : i32
    %c0_i32_1 = arith.constant 0 : i32
    return %c0_i32, %c0_i32_0 : i32, i32
  }
  func.func @transform_4(%arg0: i32) -> (i32, i32) {
    %c0_i32 = arith.constant 0 : i32
    %c0_i32_0 = arith.constant 0 : i32
    %c0_i32_1 = arith.constant 0 : i32
    return %c0_i32, %c0_i32_0 : i32, i32
  }
  func.func @transform_5(%arg0: i32) -> (i32, i32) {
    %c0_i32 = arith.constant 0 : i32
    %c0_i32_0 = arith.constant 0 : i32
    %c0_i32_1 = arith.constant 0 : i32
    return %c0_i32, %c0_i32_0 : i32, i32
  }
  func.func @transform_6(%arg0: i32) -> (i32, i32) {
    %c0_i32 = arith.constant 0 : i32
    %c0_i32_0 = arith.constant 0 : i32
    %c0_i32_1 = arith.constant 0 : i32
    return %c0_i32, %c0_i32_0 : i32, i32
  }
  func.func @transform_7(%arg0: i32) -> (i32, i32) {
    %c0_i32 = arith.constant 0 : i32
    %c0_i32_0 = arith.constant 0 : i32
    %c0_i32_1 = arith.constant 0 : i32
    return %c0_i32, %c0_i32_0 : i32, i32
  }
  func.func @transform_8(%arg0: i32) -> (i32, i32) {
    %c0_i32 = arith.constant 0 : i32
    %c0_i32_0 = arith.constant 0 : i32
    return %c0_i32, %arg0 : i32, i32
  }
}

module attributes {stable_mosaic.version = 11 : i64} {
  func.func @qfnn_stage2_kernel(%arg0: i32, %arg1: memref<8x128xf32, #tpu.memory_space<vmem>>, %arg2: memref<10x8xf32, #tpu.memory_space<vmem>>, %arg3: memref<10x1xf32, #tpu.memory_space<vmem>>, %arg4: memref<10x128xf32, #tpu.memory_space<vmem>>) attributes {dimension_semantics = [#tpu.dimension_semantics<parallel>], iteration_bounds = array<i64: 1>, scalar_prefetch = 0 : i64, scratch_operands = 0 : i64, tpu.core_type = #tpu.core_type<tc>, window_params = [{transform_indices = @transform_0, window_bounds = array<i64: 8, 128>}, {pipeline_mode = #tpu.pipeline_mode<synchronous>, transform_indices = @transform_1, window_bounds = array<i64: 10, 8>}, {pipeline_mode = #tpu.pipeline_mode<synchronous>, transform_indices = @transform_2, window_bounds = array<i64: 10, 1>}, {transform_indices = @transform_3, window_bounds = array<i64: 10, 128>}]} {
    %c0 = arith.constant 0 : index
    %c0_0 = arith.constant 0 : index
    %0 = vector.load %arg2[%c0, %c0_0] : memref<10x8xf32, #tpu.memory_space<vmem>>, vector<10x8xf32>
    %c0_1 = arith.constant 0 : index
    %c0_2 = arith.constant 0 : index
    %1 = vector.load %arg1[%c0_1, %c0_2] : memref<8x128xf32, #tpu.memory_space<vmem>>, vector<8x128xf32>
    %cst = arith.constant dense<0.000000e+00> : vector<10x128xf32>
    %2 = tpu.matmul %0, %1, %cst {dimension_numbers = #tpu.dot_dimension_numbers<[1], [0], [0], [1], [0, 0, 1, 1], [], []>} : vector<10x8xf32>, vector<8x128xf32>, vector<10x128xf32> -> vector<10x128xf32>
    %c0_3 = arith.constant 0 : index
    %c0_4 = arith.constant 0 : index
    %3 = vector.load %arg3[%c0_3, %c0_4] : memref<10x1xf32, #tpu.memory_space<vmem>>, vector<10x1xf32>
    %4 = vector.broadcast %3 : vector<10x1xf32> to vector<10x128xf32>
    %5 = arith.addf %2, %4 : vector<10x128xf32>
    %c0_5 = arith.constant 0 : index
    %c0_6 = arith.constant 0 : index
    %6 = vector.load %arg4[%c0_5, %c0_6] : memref<10x128xf32, #tpu.memory_space<vmem>>, vector<10x128xf32>
    tpu.vector_store %arg4[%c0_5, %c0_6], %5 {strides = array<i32>} : memref<10x128xf32, #tpu.memory_space<vmem>>, vector<10x128xf32>,
    return
  }
  func.func @transform_0(%arg0: i32) -> (i32, i32) {
    %c0_i32 = arith.constant 0 : i32
    %c0_i32_0 = arith.constant 0 : i32
    return %c0_i32, %arg0 : i32, i32
  }
  func.func @transform_1(%arg0: i32) -> (i32, i32) {
    %c0_i32 = arith.constant 0 : i32
    %c0_i32_0 = arith.constant 0 : i32
    %c0_i32_1 = arith.constant 0 : i32
    return %c0_i32, %c0_i32_0 : i32, i32
  }
  func.func @transform_2(%arg0: i32) -> (i32, i32) {
    %c0_i32 = arith.constant 0 : i32
    %c0_i32_0 = arith.constant 0 : i32
    %c0_i32_1 = arith.constant 0 : i32
    return %c0_i32, %c0_i32_0 : i32, i32
  }
  func.func @transform_3(%arg0: i32) -> (i32, i32) {
    %c0_i32 = arith.constant 0 : i32
    %c0_i32_0 = arith.constant 0 : i32
    return %c0_i32, %arg0 : i32, i32
  }
}

</mosaic_0001>

<llo_original>
// kernel: qfnn_forward.3
$region0: #{qfnn_forward.3}
  #allocation0 [shape = 'u32[]', space=smem, size = 0x4, offset = 0x4, fixed_abs, tag = 'smem constant byte address 0x4 - core index']
  #allocation1 [shape = 'u32[72,128]{1,0:T(1,128)}', space=vmem, size = 0x9000, scoped, tag = 'internal scratch']
  %s0 = inlined_call_operand.vmem [shape: f32[8,128], index: 0, kind: input, shape index: {}]
  %s1 = inlined_call_operand.vmem [shape: f32[10,8], index: 1, kind: input, shape index: {}]
  %s2 = inlined_call_operand.vmem [shape: f32[10,1], index: 2, kind: input, shape index: {}]
  %s3 = inlined_call_operand.vmem [shape: f32[10,128], index: 3, kind: output, shape index: {}]
  %s4 = sld [smem:[#allocation0]]
  $region22: #{qfnn_forward.3} parent=0
    _
  %s6 = ssub.s32 1, %s4
  %s7 = scalar_select 0, %s6, %s4
  // Predicated region
  $region2: #{qfnn_forward.3} parent=0 // pred_check
    _
  $region3: #{qfnn_forward.3} parent=0 // pred_check_branch
    %9 = sbr.rel (0) target = $region5
  $region4: #{qfnn_forward.3} parent=0 // pred_region
    _
  $region5: #{qfnn_forward.3} parent=0 // pred_fallthru
    _
  // Predicated region
  $region6: #{qfnn_forward.3} parent=0 // pred_check
    _
  $region7: #{qfnn_forward.3} parent=0 // pred_check_branch
    %11 = sbr.rel (0) target = $region9
  $region8: #{qfnn_forward.3} parent=0 // pred_region
    _
  $region9: #{qfnn_forward.3} parent=0 // pred_fallthru
    _
  // Predicated region
  $region10: #{qfnn_forward.3} parent=0 // pred_check
    _
  $region11: #{qfnn_forward.3} parent=0 // pred_check_branch
    %13 = sbr.rel (0) target = $region13
  $region12: #{qfnn_forward.3} parent=0 // pred_region
    _
  $region13: #{qfnn_forward.3} parent=0 // pred_fallthru
    _
  %v14 = vld [vmem:[%s1] sm:$0xff]
  %v15 = vld [vmem:[%s1 + $0x8] sm:$0x3]
  %v16 = vld [vmem:[%s0] sm:$0xff]
  %v17 = vld [vmem:[%s2] sm:$0xff]
  %v18 = vld [vmem:[%s2 + $0x8] sm:$0x3]
  %20 = vset.pattern.permute.xlu0 0
  %21 = vperm.xlu0 %20, %v17
  %v22 = vpop.permute.xlu0 %21
  %25 = vset.pattern.permute.xlu0 0
  %26 = vperm.xlu0 %25, %v18
  %v27 = vpop.permute.xlu0 %26
  %vm29 = vcmask 64512
  %v31 = vsel %vm29, %v14, 0
  %v34 = vsel %vm29, %v15, 0
  %36 = vmatpush.msra.mxu0 0.0
  %37 = vmatpush.msra.mxu0 0.0
  %38 = vmatpush.msra.mxu0 0.0
  %39 = vmatpush.msra.mxu0 0.0
  %40 = vmatpush.msra.mxu0 0.0
  %41 = vmatpush.msra.mxu0 0.0
  %42 = vmatpush.msra.mxu0 0.0
  %43 = vmatpush.msra.mxu0 0.0
  %44 = vmatpush.msra.mxu0 0.0
  %45 = vmatpush.msra.mxu0 0.0
  %46 = vmatpush.msra.mxu0 0.0
  %47 = vmatpush.msra.mxu0 0.0
  %48 = vmatpush.msra.mxu0 0.0
  %49 = vmatpush.msra.mxu0 0.0
  %50 = vmatpush.msra.mxu0 0.0
  %51 = vmatpush.msra.mxu0 %v16
  %52 = vmatmul.f32.gmra.mxu0 %v31
  %v53 = vpop.f32.mrf.mxu0
  %v54 = vadd.f32 %v22, %v53
  %55 = vmatmul.f32.gmra.mxu0 %v34
  %v56 = vpop.f32.mrf.mxu0
  %v57 = vadd.f32 %v27, %v56
  %58 = vdwg.mxu0
  %59 = vst [vmem:[%s3] sm:$0xff] %v54
  %60 = vst [vmem:[%s3 + $0x8] sm:$0x3] %v57
  // Predicated region
  $region14: #{qfnn_forward.3} parent=0 // pred_check
    _
  $region15: #{qfnn_forward.3} parent=0 // pred_check_branch
    %62 = sbr.rel (0) target = $region17
  $region16: #{qfnn_forward.3} parent=0 // pred_region
    _
  $region17: #{qfnn_forward.3} parent=0 // pred_fallthru
    _
  // Predicated region
  $region18: #{qfnn_forward.3} parent=0 // pred_check
    _
  $region19: #{qfnn_forward.3} parent=0 // pred_check_branch
    %64 = sbr.rel (0) target = $region21
  $region20: #{qfnn_forward.3} parent=0 // pred_region
    _
  $region21: #{qfnn_forward.3} parent=0 // pred_fallthru
    _

// kernel: qfnn_forward.2
$region0: #{qfnn_forward.2}
  #allocation0 [shape = 'u32[]', space=smem, size = 0x4, offset = 0x4, fixed_abs, tag = 'smem constant byte address 0x4 - core index']
  #allocation1 [shape = 'u32[72,128]{1,0:T(1,128)}', space=vmem, size = 0x9000, scoped, tag = 'internal scratch']
  %s0 = inlined_call_operand.vmem [shape: f32[10,128], index: 0, kind: input, shape index: {}]
  %s1 = inlined_call_operand.vmem [shape: f32[3,10], index: 1, kind: input, shape index: {}]
  %s2 = inlined_call_operand.vmem [shape: f32[3,1], index: 2, kind: input, shape index: {}]
  %s3 = inlined_call_operand.vmem [shape: f32[3,1], index: 3, kind: input, shape index: {}]
  %s4 = inlined_call_operand.vmem [shape: f32[3,1], index: 4, kind: input, shape index: {}]
  %s5 = inlined_call_operand.vmem [shape: f32[6,1], index: 5, kind: input, shape index: {}]
  %s6 = inlined_call_operand.vmem [shape: f32[6,1], index: 6, kind: input, shape index: {}]
  %s7 = inlined_call_operand.vmem [shape: f32[6,6], index: 7, kind: input, shape index: {}]
  %s8 = inlined_call_operand.vmem [shape: f32[8,128], index: 8, kind: output, shape index: {}]
  %s9 = sld [smem:[#allocation0]]
  $region42: #{qfnn_forward.2} parent=0
    _
  %s11 = ssub.s32 1, %s9
  %s12 = scalar_select 0, %s11, %s9
  // Predicated region
  $region2: #{qfnn_forward.2} parent=0 // pred_check
    _
  $region3: #{qfnn_forward.2} parent=0 // pred_check_branch
    %14 = sbr.rel (0) target = $region5
  $region4: #{qfnn_forward.2} parent=0 // pred_region
    _
  $region5: #{qfnn_forward.2} parent=0 // pred_fallthru
    _
  // Predicated region
  $region6: #{qfnn_forward.2} parent=0 // pred_check
    _
  $region7: #{qfnn_forward.2} parent=0 // pred_check_branch
    %16 = sbr.rel (0) target = $region9
  $region8: #{qfnn_forward.2} parent=0 // pred_region
    _
  $region9: #{qfnn_forward.2} parent=0 // pred_fallthru
    _
  // Predicated region
  $region10: #{qfnn_forward.2} parent=0 // pred_check
    _
  $region11: #{qfnn_forward.2} parent=0 // pred_check_branch
    %18 = sbr.rel (0) target = $region13
  $region12: #{qfnn_forward.2} parent=0 // pred_region
    _
  $region13: #{qfnn_forward.2} parent=0 // pred_fallthru
    _
  // Predicated region
  $region14: #{qfnn_forward.2} parent=0 // pred_check
    _
  $region15: #{qfnn_forward.2} parent=0 // pred_check_branch
    %20 = sbr.rel (0) target = $region17
  $region16: #{qfnn_forward.2} parent=0 // pred_region
    _
  $region17: #{qfnn_forward.2} parent=0 // pred_fallthru
    _
  // Predicated region
  $region18: #{qfnn_forward.2} parent=0 // pred_check
    _
  $region19: #{qfnn_forward.2} parent=0 // pred_check_branch
    %22 = sbr.rel (0) target = $region21
  $region20: #{qfnn_forward.2} parent=0 // pred_region
    _
  $region21: #{qfnn_forward.2} parent=0 // pred_fallthru
    _
  // Predicated region
  $region22: #{qfnn_forward.2} parent=0 // pred_check
    _
  $region23: #{qfnn_forward.2} parent=0 // pred_check_branch
    %24 = sbr.rel (0) target = $region25
  $region24: #{qfnn_forward.2} parent=0 // pred_region
    _
  $region25: #{qfnn_forward.2} parent=0 // pred_fallthru
    _
  // Predicated region
  $region26: #{qfnn_forward.2} parent=0 // pred_check
    _
  $region27: #{qfnn_forward.2} parent=0 // pred_check_branch
    %26 = sbr.rel (0) target = $region29
  $region28: #{qfnn_forward.2} parent=0 // pred_region
    _
  $region29: #{qfnn_forward.2} parent=0 // pred_fallthru
    _
  // Predicated region
  $region30: #{qfnn_forward.2} parent=0 // pred_check
    _
  $region31: #{qfnn_forward.2} parent=0 // pred_check_branch
    %28 = sbr.rel (0) target = $region33
  $region32: #{qfnn_forward.2} parent=0 // pred_region
    _
  $region33: #{qfnn_forward.2} parent=0 // pred_fallthru
    _
  %v29 = vld [vmem:[%s0] sm:$0xff]
  %v30 = vld [vmem:[%s0 + $0x8] sm:$0x3]
  %v31 = vld [vmem:[%s1] sm:$0x7]
  %v32 = vld [vmem:[%s2] sm:$0x7]
  %34 = vset.pattern.permute.xlu0 0
  %35 = vperm.xlu0 %34, %v32
  %v36 = vpop.permute.xlu0 %35
  %vm38 = vcmask 80896
  %v40 = vsel %vm38, %v31, 0
  %vm42 = vcmask 1041408
  %v44 = vsel %vm42, %v30, 0
  %46 = vmatpush.msra.mxu0 0.0
  %47 = vmatpush.msra.mxu0 0.0
  %48 = vmatpush.msra.mxu0 0.0
  %49 = vmatpush.msra.mxu0 0.0
  %50 = vmatpush.msra.mxu0 0.0
  %51 = vmatpush.msra.mxu0 0.0
  %52 = vmatpush.msra.mxu0 0.0
  %53 = vmatpush.msra.mxu0 0.0
  %54 = vmatpush.msra.mxu0 0.0
  %55 = vmatpush.msra.mxu0 0.0
  %56 = vmatpush.msra.mxu0 0.0
  %57 = vmatpush.msra.mxu0 0.0
  %58 = vmatpush.msra.mxu0 0.0
  %59 = vmatpush.msra.mxu0 0.0
  %60 = vmatpush.msra.mxu0 %v44
  %61 = vmatpush.msra.mxu0 %v29
  %62 = vmatmul.f32.gmra.mxu0 %v40
  %v63 = vpop.f32.mrf.mxu0
  %v64 = vadd.f32 %v36, %v63
  %65 = vdwg.mxu0
  %v67 = vrot.slane %v64, 1
  %v69 = vadd.f32 %v64, %v67
  %v70 = vrot.slane %v64, 2
  %v72 = vadd.f32 %v69, %v70
  %v73 = vmul.f32 %v72, 0.33333334
  %v74 = vperm.slane %v73, 0
  %v75 = vsub.f32 %v64, %v74
  %v76 = vmul.f32 %v75, %v75
  %v78 = vrot.slane %v76, 1
  %v80 = vadd.f32 %v76, %v78
  %v81 = vrot.slane %v76, 2
  %v83 = vadd.f32 %v80, %v81
  %v84 = vmul.f32 %v83, 0.33333334
  %v85 = vadd.f32 %v84, 1e-05
  %v86 = vrsqrt.pop %v85
  %v87 = vmul.f32 %v86, %v85
  %v88 = vmul.f32 %v87, %v86
  %v89 = vmul.f32 0.5, %v88
  %v90 = vsub.f32 1.5, %v89
  %v91 = vmul.f32 %v86, %v90
  %vm92 = vweird.f32 %v85
  %vm93 = vweird.f32 %v86
  %vm94 = vmor %vm92, %vm93
  %v95 = vsel %vm94, %v86, %v91
  %v96 = vperm.slane %v95, 0
  %v97 = vmul.f32 %v75, %v96
  %v98 = vld [vmem:[%s3] sm:$0x7]
  %100 = vset.pattern.permute.xlu0 0
  %101 = vperm.xlu0 %100, %v98
  %v102 = vpop.permute.xlu0 %101
  %v104 = vmul.f32 %v97, %v102
  %v105 = vld [vmem:[%s4] sm:$0x7]
  %107 = vset.pattern.permute.xlu0 0
  %108 = vperm.xlu0 %107, %v105
  %v109 = vpop.permute.xlu0 %108
  %v111 = vadd.f32 %v104, %v109
  %v113 = vrot.slane %v111, 5
  %vm115 = vcmask 1042432
  %v116 = vsel %vm115, %v111, %v113
  %v117 = vld [vmem:[%s5] sm:$0x3f]
  %119 = vset.pattern.permute.xlu0 0
  %120 = vperm.xlu0 %119, %v117
  %v121 = vpop.permute.xlu0 %120
  %v123 = vsub.f32 %v116, %v121
  %v124 = vmul.f32 %v123, %v123
  %v125 = vld [vmem:[%s6] sm:$0x3f]
  %127 = vset.pattern.permute.xlu0 0
  %128 = vperm.xlu0 %127, %v125
  %v129 = vpop.permute.xlu0 %128
  %v131 = vmul.f32 %v124, %v129
  %v132 = vmul.f32 %v131, 1.442695
  %v133 = vpow.pop %v132
  %v134 = vadd.f32 %v133, 1e-16
  %v135 = vrsqrt.pop %v134
  %v136 = vmul.f32 %v135, %v134
  %v137 = vmul.f32 %v136, %v135
  %v138 = vmul.f32 0.5, %v137
  %v139 = vsub.f32 1.5, %v138
  %v140 = vmul.f32 %v135, %v139
  %v141 = vmul.f32 %v134, %v140
  %vm142 = vcmp.eq.f32.partialorder %v134, inf
  %v143 = vsel %vm142, %v134, %v141
  %vm144 = vcmp.eq.f32.partialorder %v134, 0.0
  %v145 = vand.u32 %v134, 2147483648
  %v146 = vsel %vm144, %v145, %v143
  %v147 = vmin.f32 %v146, 0.99999
  %v148 = vsub.f32 1.0, %v147
  %v149 = vrsqrt.pop %v148
  %v150 = vmul.f32 %v149, %v148
  %v151 = vmul.f32 %v150, %v149
  %v152 = vmul.f32 0.5, %v151
  %v153 = vsub.f32 1.5, %v152
  %v154 = vmul.f32 %v149, %v153
  %v155 = vmul.f32 %v148, %v154
  %vm156 = vcmp.eq.f32.partialorder %v148, inf
  %v157 = vsel %vm156, %v148, %v155
  %vm158 = vcmp.eq.f32.partialorder %v148, 0.0
  %v159 = vand.u32 %v148, 2147483648
  %v160 = vsel %vm158, %v159, %v157
  %v161 = vmul.f32 %v147, -0.0187293
  %v162 = vadd.f32 %v161, 0.074261
  %v163 = vmul.f32 %v147, %v162
  %v164 = vadd.f32 %v163, -0.2121144
  %v165 = vmul.f32 %v147, %v164
  %v166 = vadd.f32 %v165, 1.5707288
  %v167 = vmul.f32 %v160, %v166
  %v168 = vsub.f32 1.5707964, %v167
  %v169 = vand.u32 2147483647, %v168
  %vm170 = vcmp.le.f32.partialorder %v169, 0.7853982
  %vm171 = vcmp.lt.s32.totalorder %v168, 0
  %v172 = vand.u32 %v168, 2139095040
  %v173 = vshrl.u32 %v172, 23
  %v174 = vsub.s32 %v173, 127
  %v175 = vand.u32 2147483647, %v168
  %v176 = vand.u32 %v175, 8388607
  %v177 = vor.u32 %v176, 8388608
  %v178 = vsub.s32 0, %v177
  %v179 = vadd.s32 %v174, 1
  %vm180 = vcmp.gt.s32.totalorder %v179, 0
  %v181 = vsel %vm180, %v179, 0
  %v182 = vshrl.u32 %v181, 5
  %v183 = vand.u32 %v181, 31
  %v184 = vsub.s32 32, %v183
  %v185 = vshrl.u32 683565275, %v184
  %v186 = vshll.u32 683565275, %v183
  %v187 = vshrl.u32 2475754826, %v184
  %v188 = vor.u32 %v186, %v187
  %v189 = vshll.u32 2475754826, %v183
  %v190 = vshrl.u32 2131351028, %v184
  %v191 = vor.u32 %v189, %v190
  %v192 = vshll.u32 2131351028, %v183
  %v193 = vshrl.u32 2102212464, %v184
  %v194 = vor.u32 %v192, %v193
  %v195 = vshll.u32 2102212464, %v183
  %v196 = vshrl.u32 920167782, %v184
  %v197 = vor.u32 %v195, %v196
  %v198 = vshll.u32 920167782, %v183
  %v199 = vshrl.u32 1326507024, %v184
  %v200 = vor.u32 %v198, %v199
  %vm201 = vcmp.lt.s32.totalorder %v182, 1
  %vm202 = vcmp.lt.s32.totalorder %v182, 2
  %vm203 = vcmp.lt.s32.totalorder %v182, 3
  %vm204 = vcmp.lt.s32.totalorder %v182, 4
  %v205 = vsel %vm201, %v185, %v188
  %v206 = vsel %vm204, %v194, 2102212464
  %v207 = vsel %vm203, %v191, %v206
  %v208 = vsel %vm202, %v205, %v207
  %v209 = vsel %vm201, %v188, %v191
  %v210 = vsel %vm204, %v197, 920167782
  %v211 = vsel %vm203, %v194, %v210
  %v212 = vsel %vm202, %v209, %v211
  %v213 = vsel %vm201, %v191, %v194
  %v214 = vsel %vm204, %v200, 1326507024
  %v215 = vsel %vm203, %v197, %v214
  %v216 = vsel %vm202, %v213, %v215
  %v217 = vshll.u32 %v177, 8
  %v218 = vand.u32 %v217, 65535
  %v219 = vshrl.u32 %v217, 16
  %v220 = vand.u32 %v216, 65535
  %v221 = vshrl.u32 %v216, 16
  %v222 = vmul.u32 %v218, %v220
  %v223 = vmul.u32 %v218, %v221
  %v224 = vmul.u32 %v219, %v220
  %v225 = vmul.u32 %v219, %v221
  %v226 = vshll.u32 %v223, 16
  %v227 = vshrl.u32 %v223, 16
  %v228 = vshll.u32 %v224, 16
  %v229 = vshrl.u32 %v224, 16
  %vm230 = vc.u32 %v222, %v226
  %v231 = vsel %vm230, 1, 0
  %v232 = vadd.s32 %v222, %v226
  %v233 = vadd.s32 %v225, %v231
  %vm234 = vc.u32 %v232, %v228
  %v235 = vsel %vm234, 1, 0
  %v236 = vadd.s32 %v232, %v228
  %v237 = vadd.s32 %v233, %v235
  %v238 = vadd.s32 %v237, %v227
  %v239 = vadd.s32 %v238, %v229
  %v240 = vand.u32 %v217, 65535
  %v241 = vshrl.u32 %v217, 16
  %v242 = vand.u32 %v212, 65535
  %v243 = vshrl.u32 %v212, 16
  %v244 = vmul.u32 %v240, %v242
  %v245 = vmul.u32 %v240, %v243
  %v246 = vmul.u32 %v241, %v242
  %v247 = vmul.u32 %v241, %v243
  %v248 = vshll.u32 %v245, 16
  %v249 = vshrl.u32 %v245, 16
  %v250 = vshll.u32 %v246, 16
  %v251 = vshrl.u32 %v246, 16
  %vm252 = vc.u32 %v244, %v248
  %v253 = vsel %vm252, 1, 0
  %v254 = vadd.s32 %v244, %v248
  %v255 = vadd.s32 %v247, %v253
  %vm256 = vc.u32 %v254, %v250
  %v257 = vsel %vm256, 1, 0
  %v258 = vadd.s32 %v254, %v250
  %v259 = vadd.s32 %v255, %v257
  %v260 = vadd.s32 %v259, %v249
  %v261 = vadd.s32 %v260, %v251
  %v262 = vmul.u32 %v217, %v208
  %v263 = vadd.s32 %v239, %v258
  %vm264 = vc.u32 %v239, %v258
  %v265 = vadd.s32 %v261, 1
  %v266 = vsel %vm264, %v265, %v261
  %v267 = vadd.s32 %v262, %v266
  %v268 = vadd.s32 %v267, 536870912
  %v269 = vshrl.u32 %v268, 30
  %v270 = vshll.u32 %v269, 30
  %v271 = vsub.s32 %v267, %v270
  %vm272 = vcmp.lt.s32.totalorder %v271, 0
  %v273 = vsub.s32 0, %v271
  %v274 = vsel %vm272, %v273, %v271
  %v275 = vclz %v274
  %v276 = vsub.s32 %v275, 2
  %vm277 = vcmp.gt.s32.totalorder 0, %v276
  %v278 = vsel %vm277, 0, %v276
  %v279 = vsub.s32 32, %v278
  %v280 = vshll.u32 %v271, %v278
  %v281 = vshrl.u32 %v263, %v279
  %v282 = vor.u32 %v280, %v281
  %v283 = vsub.s32 4294967266, %v278
  %v284 = vadd.s32 %v283, 127
  %v285 = vshll.u32 %v284, 23
  %v286 = vor.u32 4788187, %v285
  %v287 = vand.u32 2147483647, %v286
  %v289 = vcvt.s32.f32 %v282
  %v290 = vmul.f32 %v289, %v287
  %v291 = vxor.u32 %v290, 2147483648
  %v292 = vsel %vm171, %v291, %v290
  %v293 = vsub.s32 4, %v269
  %v294 = vsel %vm171, %v293, %v269
  %v295 = vsel %vm170, %v168, %v292
  %v296 = vsel %vm170, 0, %v294
  %v297 = vmul.f32 %v295, %v295
  %v298 = vmul.f32 %v297, -0.001358992
  %v299 = vadd.f32 %v298, 0.041655596
  %v300 = vmul.f32 %v297, %v299
  %v301 = vadd.f32 %v300, -0.4999988
  %v302 = vmul.f32 %v297, %v301
  %v303 = vadd.f32 1.0, %v302
  %v304 = vmul.f32 %v295, %v295
  %v305 = vmul.f32 %v304, -0.00019511016
  %v306 = vadd.f32 %v305, 0.008332121
  %v307 = vmul.f32 %v304, %v306
  %v308 = vadd.f32 %v307, -0.16666654
  %v309 = vmul.f32 %v304, %v308
  %v310 = vadd.f32 %v309, 1.0
  %v311 = vmul.f32 %v310, %v295
  %vm312 = vweird.f32 %v168
  %v313 = vadd.s32 %v296, 3
  %v314 = vand.u32 %v313, 3
  %vm315 = vcmp.lt.s32.totalorder %v314, 2
  %vm316 = vcmp.eq.s32.totalorder %v314, 0
  %v317 = vxor.u32 %v311, 2147483648
  %v318 = vsel %vm316, %v303, %v317
  %vm319 = vcmp.eq.s32.totalorder %v314, 2
  %v320 = vxor.u32 %v303, 2147483648
  %v321 = vsel %vm319, %v320, %v311
  %v322 = vsel %vm315, %v318, %v321
  %v323 = vsel %vm312, nan, %v322
  %v324 = vsub.f32 %v323, %v147
  %v325 = vand.u32 2147483647, %v168
  %vm326 = vcmp.le.f32.partialorder %v325, 0.7853982
  %vm327 = vcmp.lt.s32.totalorder %v168, 0
  %v328 = vand.u32 %v168, 2139095040
  %v329 = vshrl.u32 %v328, 23
  %v330 = vsub.s32 %v329, 127
  %v331 = vand.u32 2147483647, %v168
  %v332 = vand.u32 %v331, 8388607
  %v333 = vor.u32 %v332, 8388608
  %v334 = vsub.s32 0, %v333
  %v335 = vadd.s32 %v330, 1
  %vm336 = vcmp.gt.s32.totalorder %v335, 0
  %v337 = vsel %vm336, %v335, 0
  %v338 = vshrl.u32 %v337, 5
  %v339 = vand.u32 %v337, 31
  %v340 = vsub.s32 32, %v339
  %v341 = vshrl.u32 683565275, %v340
  %v342 = vshll.u32 683565275, %v339
  %v343 = vshrl.u32 2475754826, %v340
  %v344 = vor.u32 %v342, %v343
  %v345 = vshll.u32 2475754826, %v339
  %v346 = vshrl.u32 2131351028, %v340
  %v347 = vor.u32 %v345, %v346
  %v348 = vshll.u32 2131351028, %v339
  %v349 = vshrl.u32 2102212464, %v340
  %v350 = vor.u32 %v348, %v349
  %v351 = vshll.u32 2102212464, %v339
  %v352 = vshrl.u32 920167782, %v340
  %v353 = vor.u32 %v351, %v352
  %v354 = vshll.u32 920167782, %v339
  %v355 = vshrl.u32 1326507024, %v340
  %v356 = vor.u32 %v354, %v355
  %vm357 = vcmp.lt.s32.totalorder %v338, 1
  %vm358 = vcmp.lt.s32.totalorder %v338, 2
  %vm359 = vcmp.lt.s32.totalorder %v338, 3
  %vm360 = vcmp.lt.s32.totalorder %v338, 4
  %v361 = vsel %vm357, %v341, %v344
  %v362 = vsel %vm360, %v350, 2102212464
  %v363 = vsel %vm359, %v347, %v362
  %v364 = vsel %vm358, %v361, %v363
  %v365 = vsel %vm357, %v344, %v347
  %v366 = vsel %vm360, %v353, 920167782
  %v367 = vsel %vm359, %v350, %v366
  %v368 = vsel %vm358, %v365, %v367
  %v369 = vsel %vm357, %v347, %v350
  %v370 = vsel %vm360, %v356, 1326507024
  %v371 = vsel %vm359, %v353, %v370
  %v372 = vsel %vm358, %v369, %v371
  %v373 = vshll.u32 %v333, 8
  %v374 = vand.u32 %v373, 65535
  %v375 = vshrl.u32 %v373, 16
  %v376 = vand.u32 %v372, 65535
  %v377 = vshrl.u32 %v372, 16
  %v378 = vmul.u32 %v374, %v376
  %v379 = vmul.u32 %v374, %v377
  %v380 = vmul.u32 %v375, %v376
  %v381 = vmul.u32 %v375, %v377
  %v382 = vshll.u32 %v379, 16
  %v383 = vshrl.u32 %v379, 16
  %v384 = vshll.u32 %v380, 16
  %v385 = vshrl.u32 %v380, 16
  %vm386 = vc.u32 %v378, %v382
  %v387 = vsel %vm386, 1, 0
  %v388 = vadd.s32 %v378, %v382
  %v389 = vadd.s32 %v381, %v387
  %vm390 = vc.u32 %v388, %v384
  %v391 = vsel %vm390, 1, 0
  %v392 = vadd.s32 %v388, %v384
  %v393 = vadd.s32 %v389, %v391
  %v394 = vadd.s32 %v393, %v383
  %v395 = vadd.s32 %v394, %v385
  %v396 = vand.u32 %v373, 65535
  %v397 = vshrl.u32 %v373, 16
  %v398 = vand.u32 %v368, 65535
  %v399 = vshrl.u32 %v368, 16
  %v400 = vmul.u32 %v396, %v398
  %v401 = vmul.u32 %v396, %v399
  %v402 = vmul.u32 %v397, %v398
  %v403 = vmul.u32 %v397, %v399
  %v404 = vshll.u32 %v401, 16
  %v405 = vshrl.u32 %v401, 16
  %v406 = vshll.u32 %v402, 16
  %v407 = vshrl.u32 %v402, 16
  %vm408 = vc.u32 %v400, %v404
  %v409 = vsel %vm408, 1, 0
  %v410 = vadd.s32 %v400, %v404
  %v411 = vadd.s32 %v403, %v409
  %vm412 = vc.u32 %v410, %v406
  %v413 = vsel %vm412, 1, 0
  %v414 = vadd.s32 %v410, %v406
  %v415 = vadd.s32 %v411, %v413
  %v416 = vadd.s32 %v415, %v405
  %v417 = vadd.s32 %v416, %v407
  %v418 = vmul.u32 %v373, %v364
  %v419 = vadd.s32 %v395, %v414
  %vm420 = vc.u32 %v395, %v414
  %v421 = vadd.s32 %v417, 1
  %v422 = vsel %vm420, %v421, %v417
  %v423 = vadd.s32 %v418, %v422
  %v424 = vadd.s32 %v423, 536870912
  %v425 = vshrl.u32 %v424, 30
  %v426 = vshll.u32 %v425, 30
  %v427 = vsub.s32 %v423, %v426
  %vm428 = vcmp.lt.s32.totalorder %v427, 0
  %v429 = vsub.s32 0, %v427
  %v430 = vsel %vm428, %v429, %v427
  %v431 = vclz %v430
  %v432 = vsub.s32 %v431, 2
  %vm433 = vcmp.gt.s32.totalorder 0, %v432
  %v434 = vsel %vm433, 0, %v432
  %v435 = vsub.s32 32, %v434
  %v436 = vshll.u32 %v427, %v434
  %v437 = vshrl.u32 %v419, %v435
  %v438 = vor.u32 %v436, %v437
  %v439 = vsub.s32 4294967266, %v434
  %v440 = vadd.s32 %v439, 127
  %v441 = vshll.u32 %v440, 23
  %v442 = vor.u32 4788187, %v441
  %v443 = vand.u32 2147483647, %v442
  %v445 = vcvt.s32.f32 %v438
  %v446 = vmul.f32 %v445, %v443
  %v447 = vxor.u32 %v446, 2147483648
  %v448 = vsel %vm327, %v447, %v446
  %v449 = vsub.s32 4, %v425
  %v450 = vsel %vm327, %v449, %v425
  %v451 = vsel %vm326, %v168, %v448
  %v452 = vsel %vm326, 0, %v450
  %v453 = vmul.f32 %v451, %v451
  %v454 = vmul.f32 %v453, -0.001358992
  %v455 = vadd.f32 %v454, 0.041655596
  %v456 = vmul.f32 %v453, %v455
  %v457 = vadd.f32 %v456, -0.4999988
  %v458 = vmul.f32 %v453, %v457
  %v459 = vadd.f32 1.0, %v458
  %v460 = vmul.f32 %v451, %v451
  %v461 = vmul.f32 %v460, -0.00019511016
  %v462 = vadd.f32 %v461, 0.008332121
  %v463 = vmul.f32 %v460, %v462
  %v464 = vadd.f32 %v463, -0.16666654
  %v465 = vmul.f32 %v460, %v464
  %v466 = vadd.f32 %v465, 1.0
  %v467 = vmul.f32 %v466, %v451
  %vm468 = vweird.f32 %v168
  %v469 = vand.u32 %v452, 3
  %vm470 = vcmp.lt.s32.totalorder %v469, 2
  %vm471 = vcmp.eq.s32.totalorder %v469, 0
  %v472 = vxor.u32 %v467, 2147483648
  %v473 = vsel %vm471, %v459, %v472
  %vm474 = vcmp.eq.s32.totalorder %v469, 2
  %v475 = vxor.u32 %v459, 2147483648
  %v476 = vsel %vm474, %v475, %v467
  %v477 = vsel %vm470, %v473, %v476
  %v478 = vsel %vm468, nan, %v477
  %v479 = vrcp.pop %v478
  %v480 = vmul.f32 %v478, %v479
  %v481 = vsub.f32 1.0, %v480
  %v482 = vmul.f32 %v479, %v481
  %v483 = vadd.f32 %v479, %v482
  %vm484 = vweird.f32 %v478
  %vm485 = vweird.f32 %v479
  %vm486 = vmor %vm484, %vm485
  %v487 = vsel %vm486, %v479, %v483
  %v488 = vand.u32 2147483647, %v478
  %vm489 = vcmp.eq.f32.partialorder %v488, 8.507059e+37
  %v490 = vand.u32 %v478, 2147483648
  %v491 = vor.u32 1.1754944e-38, %v490
  %v492 = vsel %vm489, %v491, %v487
  %v493 = vmul.f32 %v324, %v492
  %v494 = vsub.f32 %v168, %v493
  %v495 = vmul.f32 %v494, 2.0
  %v496 = vld [vmem:[%s7] sm:$0x3f]
  %498 = vset.pattern.permute.xlu0 0
  %499 = vperm.xlu0 %498, %v496
  %v500 = vpop.permute.xlu0 %499
  %v502 = vmul.f32 %v495, %v500
  %v503 = vand.u32 2147483647, %v502
  %vm504 = vcmp.le.f32.partialorder %v503, 0.7853982
  %vm505 = vcmp.lt.s32.totalorder %v502, 0
  %v506 = vand.u32 %v502, 2139095040
  %v507 = vshrl.u32 %v506, 23
  %v508 = vsub.s32 %v507, 127
  %v509 = vand.u32 2147483647, %v502
  %v510 = vand.u32 %v509, 8388607
  %v511 = vor.u32 %v510, 8388608
  %v512 = vsub.s32 0, %v511
  %v513 = vadd.s32 %v508, 1
  %vm514 = vcmp.gt.s32.totalorder %v513, 0
  %v515 = vsel %vm514, %v513, 0
  %v516 = vshrl.u32 %v515, 5
  %v517 = vand.u32 %v515, 31
  %v518 = vsub.s32 32, %v517
  %v519 = vshrl.u32 683565275, %v518
  %v520 = vshll.u32 683565275, %v517
  %v521 = vshrl.u32 2475754826, %v518
  %v522 = vor.u32 %v520, %v521
  %v523 = vshll.u32 2475754826, %v517
  %v524 = vshrl.u32 2131351028, %v518
  %v525 = vor.u32 %v523, %v524
  %v526 = vshll.u32 2131351028, %v517
  %v527 = vshrl.u32 2102212464, %v518
  %v528 = vor.u32 %v526, %v527
  %v529 = vshll.u32 2102212464, %v517
  %v530 = vshrl.u32 920167782, %v518
  %v531 = vor.u32 %v529, %v530
  %v532 = vshll.u32 920167782, %v517
  %v533 = vshrl.u32 1326507024, %v518
  %v534 = vor.u32 %v532, %v533
  %vm535 = vcmp.lt.s32.totalorder %v516, 1
  %vm536 = vcmp.lt.s32.totalorder %v516, 2
  %vm537 = vcmp.lt.s32.totalorder %v516, 3
  %vm538 = vcmp.lt.s32.totalorder %v516, 4
  %v539 = vsel %vm535, %v519, %v522
  %v540 = vsel %vm538, %v528, 2102212464
  %v541 = vsel %vm537, %v525, %v540
  %v542 = vsel %vm536, %v539, %v541
  %v543 = vsel %vm535, %v522, %v525
  %v544 = vsel %vm538, %v531, 920167782
  %v545 = vsel %vm537, %v528, %v544
  %v546 = vsel %vm536, %v543, %v545
  %v547 = vsel %vm535, %v525, %v528
  %v548 = vsel %vm538, %v534, 1326507024
  %v549 = vsel %vm537, %v531, %v548
  %v550 = vsel %vm536, %v547, %v549
  %v551 = vshll.u32 %v511, 8
  %v552 = vand.u32 %v551, 65535
  %v553 = vshrl.u32 %v551, 16
  %v554 = vand.u32 %v550, 65535
  %v555 = vshrl.u32 %v550, 16
  %v556 = vmul.u32 %v552, %v554
  %v557 = vmul.u32 %v552, %v555
  %v558 = vmul.u32 %v553, %v554
  %v559 = vmul.u32 %v553, %v555
  %v560 = vshll.u32 %v557, 16
  %v561 = vshrl.u32 %v557, 16
  %v562 = vshll.u32 %v558, 16
  %v563 = vshrl.u32 %v558, 16
  %vm564 = vc.u32 %v556, %v560
  %v565 = vsel %vm564, 1, 0
  %v566 = vadd.s32 %v556, %v560
  %v567 = vadd.s32 %v559, %v565
  %vm568 = vc.u32 %v566, %v562
  %v569 = vsel %vm568, 1, 0
  %v570 = vadd.s32 %v566, %v562
  %v571 = vadd.s32 %v567, %v569
  %v572 = vadd.s32 %v571, %v561
  %v573 = vadd.s32 %v572, %v563
  %v574 = vand.u32 %v551, 65535
  %v575 = vshrl.u32 %v551, 16
  %v576 = vand.u32 %v546, 65535
  %v577 = vshrl.u32 %v546, 16
  %v578 = vmul.u32 %v574, %v576
  %v579 = vmul.u32 %v574, %v577
  %v580 = vmul.u32 %v575, %v576
  %v581 = vmul.u32 %v575, %v577
  %v582 = vshll.u32 %v579, 16
  %v583 = vshrl.u32 %v579, 16
  %v584 = vshll.u32 %v580, 16
  %v585 = vshrl.u32 %v580, 16
  %vm586 = vc.u32 %v578, %v582
  %v587 = vsel %vm586, 1, 0
  %v588 = vadd.s32 %v578, %v582
  %v589 = vadd.s32 %v581, %v587
  %vm590 = vc.u32 %v588, %v584
  %v591 = vsel %vm590, 1, 0
  %v592 = vadd.s32 %v588, %v584
  %v593 = vadd.s32 %v589, %v591
  %v594 = vadd.s32 %v593, %v583
  %v595 = vadd.s32 %v594, %v585
  %v596 = vmul.u32 %v551, %v542
  %v597 = vadd.s32 %v573, %v592
  %vm598 = vc.u32 %v573, %v592
  %v599 = vadd.s32 %v595, 1
  %v600 = vsel %vm598, %v599, %v595
  %v601 = vadd.s32 %v596, %v600
  %v602 = vadd.s32 %v601, 536870912
  %v603 = vshrl.u32 %v602, 30
  %v604 = vshll.u32 %v603, 30
  %v605 = vsub.s32 %v601, %v604
  %vm606 = vcmp.lt.s32.totalorder %v605, 0
  %v607 = vsub.s32 0, %v605
  %v608 = vsel %vm606, %v607, %v605
  %v609 = vclz %v608
  %v610 = vsub.s32 %v609, 2
  %vm611 = vcmp.gt.s32.totalorder 0, %v610
  %v612 = vsel %vm611, 0, %v610
  %v613 = vsub.s32 32, %v612
  %v614 = vshll.u32 %v605, %v612
  %v615 = vshrl.u32 %v597, %v613
  %v616 = vor.u32 %v614, %v615
  %v617 = vsub.s32 4294967266, %v612
  %v618 = vadd.s32 %v617, 127
  %v619 = vshll.u32 %v618, 23
  %v620 = vor.u32 4788187, %v619
  %v621 = vand.u32 2147483647, %v620
  %v623 = vcvt.s32.f32 %v616
  %v624 = vmul.f32 %v623, %v621
  %v625 = vxor.u32 %v624, 2147483648
  %v626 = vsel %vm505, %v625, %v624
  %v627 = vsub.s32 4, %v603
  %v628 = vsel %vm505, %v627, %v603
  %v629 = vsel %vm504, %v502, %v626
  %v630 = vsel %vm504, 0, %v628
  %v631 = vmul.f32 %v629, %v629
  %v632 = vmul.f32 %v631, -0.001358992
  %v633 = vadd.f32 %v632, 0.041655596
  %v634 = vmul.f32 %v631, %v633
  %v635 = vadd.f32 %v634, -0.4999988
  %v636 = vmul.f32 %v631, %v635
  %v637 = vadd.f32 1.0, %v636
  %v638 = vmul.f32 %v629, %v629
  %v639 = vmul.f32 %v638, -0.00019511016
  %v640 = vadd.f32 %v639, 0.008332121
  %v641 = vmul.f32 %v638, %v640
  %v642 = vadd.f32 %v641, -0.16666654
  %v643 = vmul.f32 %v638, %v642
  %v644 = vadd.f32 %v643, 1.0
  %v645 = vmul.f32 %v644, %v629
  %vm646 = vweird.f32 %v502
  %v647 = vadd.s32 %v630, 3
  %v648 = vand.u32 %v647, 3
  %vm649 = vcmp.lt.s32.totalorder %v648, 2
  %vm650 = vcmp.eq.s32.totalorder %v648, 0
  %v651 = vxor.u32 %v645, 2147483648
  %v652 = vsel %vm650, %v637, %v651
  %vm653 = vcmp.eq.s32.totalorder %v648, 2
  %v654 = vxor.u32 %v637, 2147483648
  %v655 = vsel %vm653, %v654, %v645
  %v656 = vsel %vm649, %v652, %v655
  %v657 = vsel %vm646, nan, %v656
  %v658 = vmul.f32 %v657, %v657
  %v659 = vsub.f32 1.0, %v658
  %v661 = vrot.slane %v659, 1
  %v663 = vmul.f32 %v659, %v661
  %v664 = vrot.slane %v659, 4
  %v666 = vmul.f32 %v659, %v664
  %v667 = vrot.slane %v659, 6
  %v669 = vmul.f32 %v659, %v667
  %v671 = vrot.slane %v663, 1
  %v673 = vmul.f32 %v658, %v671
  %v674 = vadd.f32 %v673, 0.0
  %v676 = vrot.slane %v666, 1
  %v678 = vmul.f32 %v658, %v676
  %v679 = vadd.f32 %v678, 0.0
  %v681 = vrot.slane %v669, 4
  %v683 = vmul.f32 %v658, %v681
  %v684 = vadd.f32 %v683, 0.0
  %v685 = vrot.slane %v663, 4
  %v687 = vmul.f32 %v658, %v685
  %v688 = vadd.f32 %v687, 0.0
  %v689 = vrot.slane %v663, 6
  %v691 = vmul.f32 %v658, %v689
  %v692 = vadd.f32 %v691, 0.0
  %v693 = vrot.slane %v666, 6
  %v695 = vmul.f32 %v658, %v693
  %v696 = vadd.f32 %v695, 0.0
  %v697 = vrot.slane %v669, 1
  %v699 = vmul.f32 %v658, %v697
  %v700 = vadd.f32 %v699, 0.0
  %701 = vset.pattern.permute.xlu0 1
  %702 = vperm.xlu0 %701, %v496
  %v703 = vpop.permute.xlu0 %702
  %v705 = vmul.f32 %v495, %v703
  %v706 = vand.u32 2147483647, %v705
  %vm707 = vcmp.le.f32.partialorder %v706, 0.7853982
  %vm708 = vcmp.lt.s32.totalorder %v705, 0
  %v709 = vand.u32 %v705, 2139095040
  %v710 = vshrl.u32 %v709, 23
  %v711 = vsub.s32 %v710, 127
  %v712 = vand.u32 2147483647, %v705
  %v713 = vand.u32 %v712, 8388607
  %v714 = vor.u32 %v713, 8388608
  %v715 = vsub.s32 0, %v714
  %v716 = vadd.s32 %v711, 1
  %vm717 = vcmp.gt.s32.totalorder %v716, 0
  %v718 = vsel %vm717, %v716, 0
  %v719 = vshrl.u32 %v718, 5
  %v720 = vand.u32 %v718, 31
  %v721 = vsub.s32 32, %v720
  %v722 = vshrl.u32 683565275, %v721
  %v723 = vshll.u32 683565275, %v720
  %v724 = vshrl.u32 2475754826, %v721
  %v725 = vor.u32 %v723, %v724
  %v726 = vshll.u32 2475754826, %v720
  %v727 = vshrl.u32 2131351028, %v721
  %v728 = vor.u32 %v726, %v727
  %v729 = vshll.u32 2131351028, %v720
  %v730 = vshrl.u32 2102212464, %v721
  %v731 = vor.u32 %v729, %v730
  %v732 = vshll.u32 2102212464, %v720
  %v733 = vshrl.u32 920167782, %v721
  %v734 = vor.u32 %v732, %v733
  %v735 = vshll.u32 920167782, %v720
  %v736 = vshrl.u32 1326507024, %v721
  %v737 = vor.u32 %v735, %v736
  %vm738 = vcmp.lt.s32.totalorder %v719, 1
  %vm739 = vcmp.lt.s32.totalorder %v719, 2
  %vm740 = vcmp.lt.s32.totalorder %v719, 3
  %vm741 = vcmp.lt.s32.totalorder %v719, 4
  %v742 = vsel %vm738, %v722, %v725
  %v743 = vsel %vm741, %v731, 2102212464
  %v744 = vsel %vm740, %v728, %v743
  %v745 = vsel %vm739, %v742, %v744
  %v746 = vsel %vm738, %v725, %v728
  %v747 = vsel %vm741, %v734, 920167782
  %v748 = vsel %vm740, %v731, %v747
  %v749 = vsel %vm739, %v746, %v748
  %v750 = vsel %vm738, %v728, %v731
  %v751 = vsel %vm741, %v737, 1326507024
  %v752 = vsel %vm740, %v734, %v751
  %v753 = vsel %vm739, %v750, %v752
  %v754 = vshll.u32 %v714, 8
  %v755 = vand.u32 %v754, 65535
  %v756 = vshrl.u32 %v754, 16
  %v757 = vand.u32 %v753, 65535
  %v758 = vshrl.u32 %v753, 16
  %v759 = vmul.u32 %v755, %v757
  %v760 = vmul.u32 %v755, %v758
  %v761 = vmul.u32 %v756, %v757
  %v762 = vmul.u32 %v756, %v758
  %v763 = vshll.u32 %v760, 16
  %v764 = vshrl.u32 %v760, 16
  %v765 = vshll.u32 %v761, 16
  %v766 = vshrl.u32 %v761, 16
  %vm767 = vc.u32 %v759, %v763
  %v768 = vsel %vm767, 1, 0
  %v769 = vadd.s32 %v759, %v763
  %v770 = vadd.s32 %v762, %v768
  %vm771 = vc.u32 %v769, %v765
  %v772 = vsel %vm771, 1, 0
  %v773 = vadd.s32 %v769, %v765
  %v774 = vadd.s32 %v770, %v772
  %v775 = vadd.s32 %v774, %v764
  %v776 = vadd.s32 %v775, %v766
  %v777 = vand.u32 %v754, 65535
  %v778 = vshrl.u32 %v754, 16
  %v779 = vand.u32 %v749, 65535
  %v780 = vshrl.u32 %v749, 16
  %v781 = vmul.u32 %v777, %v779
  %v782 = vmul.u32 %v777, %v780
  %v783 = vmul.u32 %v778, %v779
  %v784 = vmul.u32 %v778, %v780
  %v785 = vshll.u32 %v782, 16
  %v786 = vshrl.u32 %v782, 16
  %v787 = vshll.u32 %v783, 16
  %v788 = vshrl.u32 %v783, 16
  %vm789 = vc.u32 %v781, %v785
  %v790 = vsel %vm789, 1, 0
  %v791 = vadd.s32 %v781, %v785
  %v792 = vadd.s32 %v784, %v790
  %vm793 = vc.u32 %v791, %v787
  %v794 = vsel %vm793, 1, 0
  %v795 = vadd.s32 %v791, %v787
  %v796 = vadd.s32 %v792, %v794
  %v797 = vadd.s32 %v796, %v786
  %v798 = vadd.s32 %v797, %v788
  %v799 = vmul.u32 %v754, %v745
  %v800 = vadd.s32 %v776, %v795
  %vm801 = vc.u32 %v776, %v795
  %v802 = vadd.s32 %v798, 1
  %v803 = vsel %vm801, %v802, %v798
  %v804 = vadd.s32 %v799, %v803
  %v805 = vadd.s32 %v804, 536870912
  %v806 = vshrl.u32 %v805, 30
  %v807 = vshll.u32 %v806, 30
  %v808 = vsub.s32 %v804, %v807
  %vm809 = vcmp.lt.s32.totalorder %v808, 0
  %v810 = vsub.s32 0, %v808
  %v811 = vsel %vm809, %v810, %v808
  %v812 = vclz %v811
  %v813 = vsub.s32 %v812, 2
  %vm814 = vcmp.gt.s32.totalorder 0, %v813
  %v815 = vsel %vm814, 0, %v813
  %v816 = vsub.s32 32, %v815
  %v817 = vshll.u32 %v808, %v815
  %v818 = vshrl.u32 %v800, %v816
  %v819 = vor.u32 %v817, %v818
  %v820 = vsub.s32 4294967266, %v815
  %v821 = vadd.s32 %v820, 127
  %v822 = vshll.u32 %v821, 23
  %v823 = vor.u32 4788187, %v822
  %v824 = vand.u32 2147483647, %v823
  %v826 = vcvt.s32.f32 %v819
  %v827 = vmul.f32 %v826, %v824
  %v828 = vxor.u32 %v827, 2147483648
  %v829 = vsel %vm708, %v828, %v827
  %v830 = vsub.s32 4, %v806
  %v831 = vsel %vm708, %v830, %v806
  %v832 = vsel %vm707, %v705, %v829
  %v833 = vsel %vm707, 0, %v831
  %v834 = vmul.f32 %v832, %v832
  %v835 = vmul.f32 %v834, -0.001358992
  %v836 = vadd.f32 %v835, 0.041655596
  %v837 = vmul.f32 %v834, %v836
  %v838 = vadd.f32 %v837, -0.4999988
  %v839 = vmul.f32 %v834, %v838
  %v840 = vadd.f32 1.0, %v839
  %v841 = vmul.f32 %v832, %v832
  %v842 = vmul.f32 %v841, -0.00019511016
  %v843 = vadd.f32 %v842, 0.008332121
  %v844 = vmul.f32 %v841, %v843
  %v845 = vadd.f32 %v844, -0.16666654
  %v846 = vmul.f32 %v841, %v845
  %v847 = vadd.f32 %v846, 1.0
  %v848 = vmul.f32 %v847, %v832
  %vm849 = vweird.f32 %v705
  %v850 = vadd.s32 %v833, 3
  %v851 = vand.u32 %v850, 3
  %vm852 = vcmp.lt.s32.totalorder %v851, 2
  %vm853 = vcmp.eq.s32.totalorder %v851, 0
  %v854 = vxor.u32 %v848, 2147483648
  %v855 = vsel %vm853, %v840, %v854
  %vm856 = vcmp.eq.s32.totalorder %v851, 2
  %v857 = vxor.u32 %v840, 2147483648
  %v858 = vsel %vm856, %v857, %v848
  %v859 = vsel %vm852, %v855, %v858
  %v860 = vsel %vm849, nan, %v859
  %v861 = vmul.f32 %v860, %v860
  %v862 = vsub.f32 1.0, %v861
  %v864 = vrot.slane %v862, 1
  %v866 = vmul.f32 %v862, %v864
  %v867 = vrot.slane %v862, 4
  %v869 = vmul.f32 %v862, %v867
  %v870 = vrot.slane %v862, 6
  %v872 = vmul.f32 %v862, %v870
  %v874 = vrot.slane %v866, 1
  %v876 = vmul.f32 %v861, %v874
  %v877 = vadd.f32 %v674, %v876
  %v879 = vrot.slane %v869, 1
  %v881 = vmul.f32 %v861, %v879
  %v882 = vadd.f32 %v679, %v881
  %v884 = vrot.slane %v872, 4
  %v886 = vmul.f32 %v861, %v884
  %v887 = vadd.f32 %v684, %v886
  %v888 = vrot.slane %v866, 4
  %v890 = vmul.f32 %v861, %v888
  %v891 = vadd.f32 %v688, %v890
  %v892 = vrot.slane %v866, 6
  %v894 = vmul.f32 %v861, %v892
  %v895 = vadd.f32 %v692, %v894
  %v896 = vrot.slane %v869, 6
  %v898 = vmul.f32 %v861, %v896
  %v899 = vadd.f32 %v696, %v898
  %v900 = vrot.slane %v872, 1
  %v902 = vmul.f32 %v861, %v900
  %v903 = vadd.f32 %v700, %v902
  %904 = vset.pattern.permute.xlu0 2
  %905 = vperm.xlu0 %904, %v496
  %v906 = vpop.permute.xlu0 %905
  %v908 = vmul.f32 %v495, %v906
  %v909 = vand.u32 2147483647, %v908
  %vm910 = vcmp.le.f32.partialorder %v909, 0.7853982
  %vm911 = vcmp.lt.s32.totalorder %v908, 0
  %v912 = vand.u32 %v908, 2139095040
  %v913 = vshrl.u32 %v912, 23
  %v914 = vsub.s32 %v913, 127
  %v915 = vand.u32 2147483647, %v908
  %v916 = vand.u32 %v915, 8388607
  %v917 = vor.u32 %v916, 8388608
  %v918 = vsub.s32 0, %v917
  %v919 = vadd.s32 %v914, 1
  %vm920 = vcmp.gt.s32.totalorder %v919, 0
  %v921 = vsel %vm920, %v919, 0
  %v922 = vshrl.u32 %v921, 5
  %v923 = vand.u32 %v921, 31
  %v924 = vsub.s32 32, %v923
  %v925 = vshrl.u32 683565275, %v924
  %v926 = vshll.u32 683565275, %v923
  %v927 = vshrl.u32 2475754826, %v924
  %v928 = vor.u32 %v926, %v927
  %v929 = vshll.u32 2475754826, %v923
  %v930 = vshrl.u32 2131351028, %v924
  %v931 = vor.u32 %v929, %v930
  %v932 = vshll.u32 2131351028, %v923
  %v933 = vshrl.u32 2102212464, %v924
  %v934 = vor.u32 %v932, %v933
  %v935 = vshll.u32 2102212464, %v923
  %v936 = vshrl.u32 920167782, %v924
  %v937 = vor.u32 %v935, %v936
  %v938 = vshll.u32 920167782, %v923
  %v939 = vshrl.u32 1326507024, %v924
  %v940 = vor.u32 %v938, %v939
  %vm941 = vcmp.lt.s32.totalorder %v922, 1
  %vm942 = vcmp.lt.s32.totalorder %v922, 2
  %vm943 = vcmp.lt.s32.totalorder %v922, 3
  %vm944 = vcmp.lt.s32.totalorder %v922, 4
  %v945 = vsel %vm941, %v925, %v928
  %v946 = vsel %vm944, %v934, 2102212464
  %v947 = vsel %vm943, %v931, %v946
  %v948 = vsel %vm942, %v945, %v947
  %v949 = vsel %vm941, %v928, %v931
  %v950 = vsel %vm944, %v937, 920167782
  %v951 = vsel %vm943, %v934, %v950
  %v952 = vsel %vm942, %v949, %v951
  %v953 = vsel %vm941, %v931, %v934
  %v954 = vsel %vm944, %v940, 1326507024
  %v955 = vsel %vm943, %v937, %v954
  %v956 = vsel %vm942, %v953, %v955
  %v957 = vshll.u32 %v917, 8
  %v958 = vand.u32 %v957, 65535
  %v959 = vshrl.u32 %v957, 16
  %v960 = vand.u32 %v956, 65535
  %v961 = vshrl.u32 %v956, 16
  %v962 = vmul.u32 %v958, %v960
  %v963 = vmul.u32 %v958, %v961
  %v964 = vmul.u32 %v959, %v960
  %v965 = vmul.u32 %v959, %v961
  %v966 = vshll.u32 %v963, 16
  %v967 = vshrl.u32 %v963, 16
  %v968 = vshll.u32 %v964, 16
  %v969 = vshrl.u32 %v964, 16
  %vm970 = vc.u32 %v962, %v966
  %v971 = vsel %vm970, 1, 0
  %v972 = vadd.s32 %v962, %v966
  %v973 = vadd.s32 %v965, %v971
  %vm974 = vc.u32 %v972, %v968
  %v975 = vsel %vm974, 1, 0
  %v976 = vadd.s32 %v972, %v968
  %v977 = vadd.s32 %v973, %v975
  %v978 = vadd.s32 %v977, %v967
  %v979 = vadd.s32 %v978, %v969
  %v980 = vand.u32 %v957, 65535
  %v981 = vshrl.u32 %v957, 16
  %v982 = vand.u32 %v952, 65535
  %v983 = vshrl.u32 %v952, 16
  %v984 = vmul.u32 %v980, %v982
  %v985 = vmul.u32 %v980, %v983
  %v986 = vmul.u32 %v981, %v982
  %v987 = vmul.u32 %v981, %v983
  %v988 = vshll.u32 %v985, 16
  %v989 = vshrl.u32 %v985, 16
  %v990 = vshll.u32 %v986, 16
  %v991 = vshrl.u32 %v986, 16
  %vm992 = vc.u32 %v984, %v988
  %v993 = vsel %vm992, 1, 0
  %v994 = vadd.s32 %v984, %v988
  %v995 = vadd.s32 %v987, %v993
  %vm996 = vc.u32 %v994, %v990
  %v997 = vsel %vm996, 1, 0
  %v998 = vadd.s32 %v994, %v990
  %v999 = vadd.s32 %v995, %v997
  %v1000 = vadd.s32 %v999, %v989
  %v1001 = vadd.s32 %v1000, %v991
  %v1002 = vmul.u32 %v957, %v948
  %v1003 = vadd.s32 %v979, %v998
  %vm1004 = vc.u32 %v979, %v998
  %v1005 = vadd.s32 %v1001, 1
  %v1006 = vsel %vm1004, %v1005, %v1001
  %v1007 = vadd.s32 %v1002, %v1006
  %v1008 = vadd.s32 %v1007, 536870912
  %v1009 = vshrl.u32 %v1008, 30
  %v1010 = vshll.u32 %v1009, 30
  %v1011 = vsub.s32 %v1007, %v1010
  %vm1012 = vcmp.lt.s32.totalorder %v1011, 0
  %v1013 = vsub.s32 0, %v1011
  %v1014 = vsel %vm1012, %v1013, %v1011
  %v1015 = vclz %v1014
  %v1016 = vsub.s32 %v1015, 2
  %vm1017 = vcmp.gt.s32.totalorder 0, %v1016
  %v1018 = vsel %vm1017, 0, %v1016
  %v1019 = vsub.s32 32, %v1018
  %v1020 = vshll.u32 %v1011, %v1018
  %v1021 = vshrl.u32 %v1003, %v1019
  %v1022 = vor.u32 %v1020, %v1021
  %v1023 = vsub.s32 4294967266, %v1018
  %v1024 = vadd.s32 %v1023, 127
  %v1025 = vshll.u32 %v1024, 23
  %v1026 = vor.u32 4788187, %v1025
  %v1027 = vand.u32 2147483647, %v1026
  %v1029 = vcvt.s32.f32 %v1022
  %v1030 = vmul.f32 %v1029, %v1027
  %v1031 = vxor.u32 %v1030, 2147483648
  %v1032 = vsel %vm911, %v1031, %v1030
  %v1033 = vsub.s32 4, %v1009
  %v1034 = vsel %vm911, %v1033, %v1009
  %v1035 = vsel %vm910, %v908, %v1032
  %v1036 = vsel %vm910, 0, %v1034
  %v1037 = vmul.f32 %v1035, %v1035
  %v1038 = vmul.f32 %v1037, -0.001358992
  %v1039 = vadd.f32 %v1038, 0.041655596
  %v1040 = vmul.f32 %v1037, %v1039
  %v1041 = vadd.f32 %v1040, -0.4999988
  %v1042 = vmul.f32 %v1037, %v1041
  %v1043 = vadd.f32 1.0, %v1042
  %v1044 = vmul.f32 %v1035, %v1035
  %v1045 = vmul.f32 %v1044, -0.00019511016
  %v1046 = vadd.f32 %v1045, 0.008332121
  %v1047 = vmul.f32 %v1044, %v1046
  %v1048 = vadd.f32 %v1047, -0.16666654
  %v1049 = vmul.f32 %v1044, %v1048
  %v1050 = vadd.f32 %v1049, 1.0
  %v1051 = vmul.f32 %v1050, %v1035
  %vm1052 = vweird.f32 %v908
  %v1053 = vadd.s32 %v1036, 3
  %v1054 = vand.u32 %v1053, 3
  %vm1055 = vcmp.lt.s32.totalorder %v1054, 2
  %vm1056 = vcmp.eq.s32.totalorder %v1054, 0
  %v1057 = vxor.u32 %v1051, 2147483648
  %v1058 = vsel %vm1056, %v1043, %v1057
  %vm1059 = vcmp.eq.s32.totalorder %v1054, 2
  %v1060 = vxor.u32 %v1043, 2147483648
  %v1061 = vsel %vm1059, %v1060, %v1051
  %v1062 = vsel %vm1055, %v1058, %v1061
  %v1063 = vsel %vm1052, nan, %v1062
  %v1064 = vmul.f32 %v1063, %v1063
  %v1065 = vsub.f32 1.0, %v1064
  %v1067 = vrot.slane %v1065, 1
  %v1069 = vmul.f32 %v1065, %v1067
  %v1070 = vrot.slane %v1065, 4
  %v1072 = vmul.f32 %v1065, %v1070
  %v1073 = vrot.slane %v1065, 6
  %v1075 = vmul.f32 %v1065, %v1073
  %v1077 = vrot.slane %v1069, 1
  %v1079 = vmul.f32 %v1064, %v1077
  %v1080 = vadd.f32 %v877, %v1079
  %v1082 = vrot.slane %v1072, 1
  %v1084 = vmul.f32 %v1064, %v1082
  %v1085 = vadd.f32 %v882, %v1084
  %v1087 = vrot.slane %v1075, 4
  %v1089 = vmul.f32 %v1064, %v1087
  %v1090 = vadd.f32 %v887, %v1089
  %v1091 = vrot.slane %v1069, 4
  %v1093 = vmul.f32 %v1064, %v1091
  %v1094 = vadd.f32 %v891, %v1093
  %v1095 = vrot.slane %v1069, 6
  %v1097 = vmul.f32 %v1064, %v1095
  %v1098 = vadd.f32 %v895, %v1097
  %v1099 = vrot.slane %v1072, 6
  %v1101 = vmul.f32 %v1064, %v1099
  %v1102 = vadd.f32 %v899, %v1101
  %v1103 = vrot.slane %v1075, 1
  %v1105 = vmul.f32 %v1064, %v1103
  %v1106 = vadd.f32 %v903, %v1105
  %1107 = vset.pattern.permute.xlu0 3
  %1108 = vperm.xlu0 %1107, %v496
  %v1109 = vpop.permute.xlu0 %1108
  %v1111 = vmul.f32 %v495, %v1109
  %v1112 = vand.u32 2147483647, %v1111
  %vm1113 = vcmp.le.f32.partialorder %v1112, 0.7853982
  %vm1114 = vcmp.lt.s32.totalorder %v1111, 0
  %v1115 = vand.u32 %v1111, 2139095040
  %v1116 = vshrl.u32 %v1115, 23
  %v1117 = vsub.s32 %v1116, 127
  %v1118 = vand.u32 2147483647, %v1111
  %v1119 = vand.u32 %v1118, 8388607
  %v1120 = vor.u32 %v1119, 8388608
  %v1121 = vsub.s32 0, %v1120
  %v1122 = vadd.s32 %v1117, 1
  %vm1123 = vcmp.gt.s32.totalorder %v1122, 0
  %v1124 = vsel %vm1123, %v1122, 0
  %v1125 = vshrl.u32 %v1124, 5
  %v1126 = vand.u32 %v1124, 31
  %v1127 = vsub.s32 32, %v1126
  %v1128 = vshrl.u32 683565275, %v1127
  %v1129 = vshll.u32 683565275, %v1126
  %v1130 = vshrl.u32 2475754826, %v1127
  %v1131 = vor.u32 %v1129, %v1130
  %v1132 = vshll.u32 2475754826, %v1126
  %v1133 = vshrl.u32 2131351028, %v1127
  %v1134 = vor.u32 %v1132, %v1133
  %v1135 = vshll.u32 2131351028, %v1126
  %v1136 = vshrl.u32 2102212464, %v1127
  %v1137 = vor.u32 %v1135, %v1136
  %v1138 = vshll.u32 2102212464, %v1126
  %v1139 = vshrl.u32 920167782, %v1127
  %v1140 = vor.u32 %v1138, %v1139
  %v1141 = vshll.u32 920167782, %v1126
  %v1142 = vshrl.u32 1326507024, %v1127
  %v1143 = vor.u32 %v1141, %v1142
  %vm1144 = vcmp.lt.s32.totalorder %v1125, 1
  %vm1145 = vcmp.lt.s32.totalorder %v1125, 2
  %vm1146 = vcmp.lt.s32.totalorder %v1125, 3
  %vm1147 = vcmp.lt.s32.totalorder %v1125, 4
  %v1148 = vsel %vm1144, %v1128, %v1131
  %v1149 = vsel %vm1147, %v1137, 2102212464
  %v1150 = vsel %vm1146, %v1134, %v1149
  %v1151 = vsel %vm1145, %v1148, %v1150
  %v1152 = vsel %vm1144, %v1131, %v1134
  %v1153 = vsel %vm1147, %v1140, 920167782
  %v1154 = vsel %vm1146, %v1137, %v1153
  %v1155 = vsel %vm1145, %v1152, %v1154
  %v1156 = vsel %vm1144, %v1134, %v1137
  %v1157 = vsel %vm1147, %v1143, 1326507024
  %v1158 = vsel %vm1146, %v1140, %v1157
  %v1159 = vsel %vm1145, %v1156, %v1158
  %v1160 = vshll.u32 %v1120, 8
  %v1161 = vand.u32 %v1160, 65535
  %v1162 = vshrl.u32 %v1160, 16
  %v1163 = vand.u32 %v1159, 65535
  %v1164 = vshrl.u32 %v1159, 16
  %v1165 = vmul.u32 %v1161, %v1163
  %v1166 = vmul.u32 %v1161, %v1164
  %v1167 = vmul.u32 %v1162, %v1163
  %v1168 = vmul.u32 %v1162, %v1164
  %v1169 = vshll.u32 %v1166, 16
  %v1170 = vshrl.u32 %v1166, 16
  %v1171 = vshll.u32 %v1167, 16
  %v1172 = vshrl.u32 %v1167, 16
  %vm1173 = vc.u32 %v1165, %v1169
  %v1174 = vsel %vm1173, 1, 0
  %v1175 = vadd.s32 %v1165, %v1169
  %v1176 = vadd.s32 %v1168, %v1174
  %vm1177 = vc.u32 %v1175, %v1171
  %v1178 = vsel %vm1177, 1, 0
  %v1179 = vadd.s32 %v1175, %v1171
  %v1180 = vadd.s32 %v1176, %v1178
  %v1181 = vadd.s32 %v1180, %v1170
  %v1182 = vadd.s32 %v1181, %v1172
  %v1183 = vand.u32 %v1160, 65535
  %v1184 = vshrl.u32 %v1160, 16
  %v1185 = vand.u32 %v1155, 65535
  %v1186 = vshrl.u32 %v1155, 16
  %v1187 = vmul.u32 %v1183, %v1185
  %v1188 = vmul.u32 %v1183, %v1186
  %v1189 = vmul.u32 %v1184, %v1185
  %v1190 = vmul.u32 %v1184, %v1186
  %v1191 = vshll.u32 %v1188, 16
  %v1192 = vshrl.u32 %v1188, 16
  %v1193 = vshll.u32 %v1189, 16
  %v1194 = vshrl.u32 %v1189, 16
  %vm1195 = vc.u32 %v1187, %v1191
  %v1196 = vsel %vm1195, 1, 0
  %v1197 = vadd.s32 %v1187, %v1191
  %v1198 = vadd.s32 %v1190, %v1196
  %vm1199 = vc.u32 %v1197, %v1193
  %v1200 = vsel %vm1199, 1, 0
  %v1201 = vadd.s32 %v1197, %v1193
  %v1202 = vadd.s32 %v1198, %v1200
  %v1203 = vadd.s32 %v1202, %v1192
  %v1204 = vadd.s32 %v1203, %v1194
  %v1205 = vmul.u32 %v1160, %v1151
  %v1206 = vadd.s32 %v1182, %v1201
  %vm1207 = vc.u32 %v1182, %v1201
  %v1208 = vadd.s32 %v1204, 1
  %v1209 = vsel %vm1207, %v1208, %v1204
  %v1210 = vadd.s32 %v1205, %v1209
  %v1211 = vadd.s32 %v1210, 536870912
  %v1212 = vshrl.u32 %v1211, 30
  %v1213 = vshll.u32 %v1212, 30
  %v1214 = vsub.s32 %v1210, %v1213
  %vm1215 = vcmp.lt.s32.totalorder %v1214, 0
  %v1216 = vsub.s32 0, %v1214
  %v1217 = vsel %vm1215, %v1216, %v1214
  %v1218 = vclz %v1217
  %v1219 = vsub.s32 %v1218, 2
  %vm1220 = vcmp.gt.s32.totalorder 0, %v1219
  %v1221 = vsel %vm1220, 0, %v1219
  %v1222 = vsub.s32 32, %v1221
  %v1223 = vshll.u32 %v1214, %v1221
  %v1224 = vshrl.u32 %v1206, %v1222
  %v1225 = vor.u32 %v1223, %v1224
  %v1226 = vsub.s32 4294967266, %v1221
  %v1227 = vadd.s32 %v1226, 127
  %v1228 = vshll.u32 %v1227, 23
  %v1229 = vor.u32 4788187, %v1228
  %v1230 = vand.u32 2147483647, %v1229
  %v1232 = vcvt.s32.f32 %v1225
  %v1233 = vmul.f32 %v1232, %v1230
  %v1234 = vxor.u32 %v1233, 2147483648
  %v1235 = vsel %vm1114, %v1234, %v1233
  %v1236 = vsub.s32 4, %v1212
  %v1237 = vsel %vm1114, %v1236, %v1212
  %v1238 = vsel %vm1113, %v1111, %v1235
  %v1239 = vsel %vm1113, 0, %v1237
  %v1240 = vmul.f32 %v1238, %v1238
  %v1241 = vmul.f32 %v1240, -0.001358992
  %v1242 = vadd.f32 %v1241, 0.041655596
  %v1243 = vmul.f32 %v1240, %v1242
  %v1244 = vadd.f32 %v1243, -0.4999988
  %v1245 = vmul.f32 %v1240, %v1244
  %v1246 = vadd.f32 1.0, %v1245
  %v1247 = vmul.f32 %v1238, %v1238
  %v1248 = vmul.f32 %v1247, -0.00019511016
  %v1249 = vadd.f32 %v1248, 0.008332121
  %v1250 = vmul.f32 %v1247, %v1249
  %v1251 = vadd.f32 %v1250, -0.16666654
  %v1252 = vmul.f32 %v1247, %v1251
  %v1253 = vadd.f32 %v1252, 1.0
  %v1254 = vmul.f32 %v1253, %v1238
  %vm1255 = vweird.f32 %v1111
  %v1256 = vadd.s32 %v1239, 3
  %v1257 = vand.u32 %v1256, 3
  %vm1258 = vcmp.lt.s32.totalorder %v1257, 2
  %vm1259 = vcmp.eq.s32.totalorder %v1257, 0
  %v1260 = vxor.u32 %v1254, 2147483648
  %v1261 = vsel %vm1259, %v1246, %v1260
  %vm1262 = vcmp.eq.s32.totalorder %v1257, 2
  %v1263 = vxor.u32 %v1246, 2147483648
  %v1264 = vsel %vm1262, %v1263, %v1254
  %v1265 = vsel %vm1258, %v1261, %v1264
  %v1266 = vsel %vm1255, nan, %v1265
  %v1267 = vmul.f32 %v1266, %v1266
  %v1268 = vsub.f32 1.0, %v1267
  %v1270 = vrot.slane %v1268, 1
  %v1272 = vmul.f32 %v1268, %v1270
  %v1273 = vrot.slane %v1268, 4
  %v1275 = vmul.f32 %v1268, %v1273
  %v1276 = vrot.slane %v1268, 6
  %v1278 = vmul.f32 %v1268, %v1276
  %v1280 = vrot.slane %v1272, 1
  %v1282 = vmul.f32 %v1267, %v1280
  %v1283 = vadd.f32 %v1080, %v1282
  %v1285 = vrot.slane %v1275, 1
  %v1287 = vmul.f32 %v1267, %v1285
  %v1288 = vadd.f32 %v1085, %v1287
  %v1290 = vrot.slane %v1278, 4
  %v1292 = vmul.f32 %v1267, %v1290
  %v1293 = vadd.f32 %v1090, %v1292
  %v1294 = vrot.slane %v1272, 4
  %v1296 = vmul.f32 %v1267, %v1294
  %v1297 = vadd.f32 %v1094, %v1296
  %v1298 = vrot.slane %v1272, 6
  %v1300 = vmul.f32 %v1267, %v1298
  %v1301 = vadd.f32 %v1098, %v1300
  %v1302 = vrot.slane %v1275, 6
  %v1304 = vmul.f32 %v1267, %v1302
  %v1305 = vadd.f32 %v1102, %v1304
  %v1306 = vrot.slane %v1278, 1
  %v1308 = vmul.f32 %v1267, %v1306
  %v1309 = vadd.f32 %v1106, %v1308
  %1310 = vset.pattern.permute.xlu0 4
  %1311 = vperm.xlu0 %1310, %v496
  %v1312 = vpop.permute.xlu0 %1311
  %v1314 = vmul.f32 %v495, %v1312
  %v1315 = vand.u32 2147483647, %v1314
  %vm1316 = vcmp.le.f32.partialorder %v1315, 0.7853982
  %vm1317 = vcmp.lt.s32.totalorder %v1314, 0
  %v1318 = vand.u32 %v1314, 2139095040
  %v1319 = vshrl.u32 %v1318, 23
  %v1320 = vsub.s32 %v1319, 127
  %v1321 = vand.u32 2147483647, %v1314
  %v1322 = vand.u32 %v1321, 8388607
  %v1323 = vor.u32 %v1322, 8388608
  %v1324 = vsub.s32 0, %v1323
  %v1325 = vadd.s32 %v1320, 1
  %vm1326 = vcmp.gt.s32.totalorder %v1325, 0
  %v1327 = vsel %vm1326, %v1325, 0
  %v1328 = vshrl.u32 %v1327, 5
  %v1329 = vand.u32 %v1327, 31
  %v1330 = vsub.s32 32, %v1329
  %v1331 = vshrl.u32 683565275, %v1330
  %v1332 = vshll.u32 683565275, %v1329
  %v1333 = vshrl.u32 2475754826, %v1330
  %v1334 = vor.u32 %v1332, %v1333
  %v1335 = vshll.u32 2475754826, %v1329
  %v1336 = vshrl.u32 2131351028, %v1330
  %v1337 = vor.u32 %v1335, %v1336
  %v1338 = vshll.u32 2131351028, %v1329
  %v1339 = vshrl.u32 2102212464, %v1330
  %v1340 = vor.u32 %v1338, %v1339
  %v1341 = vshll.u32 2102212464, %v1329
  %v1342 = vshrl.u32 920167782, %v1330
  %v1343 = vor.u32 %v1341, %v1342
  %v1344 = vshll.u32 920167782, %v1329
  %v1345 = vshrl.u32 1326507024, %v1330
  %v1346 = vor.u32 %v1344, %v1345
  %vm1347 = vcmp.lt.s32.totalorder %v1328, 1
  %vm1348 = vcmp.lt.s32.totalorder %v1328, 2
  %vm1349 = vcmp.lt.s32.totalorder %v1328, 3
  %vm1350 = vcmp.lt.s32.totalorder %v1328, 4
  %v1351 = vsel %vm1347, %v1331, %v1334
  %v1352 = vsel %vm1350, %v1340, 2102212464
  %v1353 = vsel %vm1349, %v1337, %v1352
  %v1354 = vsel %vm1348, %v1351, %v1353
  %v1355 = vsel %vm1347, %v1334, %v1337
  %v1356 = vsel %vm1350, %v1343, 920167782
  %v1357 = vsel %vm1349, %v1340, %v1356
  %v1358 = vsel %vm1348, %v1355, %v1357
  %v1359 = vsel %vm1347, %v1337, %v1340
  %v1360 = vsel %vm1350, %v1346, 1326507024
  %v1361 = vsel %vm1349, %v1343, %v1360
  %v1362 = vsel %vm1348, %v1359, %v1361
  %v1363 = vshll.u32 %v1323, 8
  %v1364 = vand.u32 %v1363, 65535
  %v1365 = vshrl.u32 %v1363, 16
  %v1366 = vand.u32 %v1362, 65535
  %v1367 = vshrl.u32 %v1362, 16
  %v1368 = vmul.u32 %v1364, %v1366
  %v1369 = vmul.u32 %v1364, %v1367
  %v1370 = vmul.u32 %v1365, %v1366
  %v1371 = vmul.u32 %v1365, %v1367
  %v1372 = vshll.u32 %v1369, 16
  %v1373 = vshrl.u32 %v1369, 16
  %v1374 = vshll.u32 %v1370, 16
  %v1375 = vshrl.u32 %v1370, 16
  %vm1376 = vc.u32 %v1368, %v1372
  %v1377 = vsel %vm1376, 1, 0
  %v1378 = vadd.s32 %v1368, %v1372
  %v1379 = vadd.s32 %v1371, %v1377
  %vm1380 = vc.u32 %v1378, %v1374
  %v1381 = vsel %vm1380, 1, 0
  %v1382 = vadd.s32 %v1378, %v1374
  %v1383 = vadd.s32 %v1379, %v1381
  %v1384 = vadd.s32 %v1383, %v1373
  %v1385 = vadd.s32 %v1384, %v1375
  %v1386 = vand.u32 %v1363, 65535
  %v1387 = vshrl.u32 %v1363, 16
  %v1388 = vand.u32 %v1358, 65535
  %v1389 = vshrl.u32 %v1358, 16
  %v1390 = vmul.u32 %v1386, %v1388
  %v1391 = vmul.u32 %v1386, %v1389
  %v1392 = vmul.u32 %v1387, %v1388
  %v1393 = vmul.u32 %v1387, %v1389
  %v1394 = vshll.u32 %v1391, 16
  %v1395 = vshrl.u32 %v1391, 16
  %v1396 = vshll.u32 %v1392, 16
  %v1397 = vshrl.u32 %v1392, 16
  %vm1398 = vc.u32 %v1390, %v1394
  %v1399 = vsel %vm1398, 1, 0
  %v1400 = vadd.s32 %v1390, %v1394
  %v1401 = vadd.s32 %v1393, %v1399
  %vm1402 = vc.u32 %v1400, %v1396
  %v1403 = vsel %vm1402, 1, 0
  %v1404 = vadd.s32 %v1400, %v1396
  %v1405 = vadd.s32 %v1401, %v1403
  %v1406 = vadd.s32 %v1405, %v1395
  %v1407 = vadd.s32 %v1406, %v1397
  %v1408 = vmul.u32 %v1363, %v1354
  %v1409 = vadd.s32 %v1385, %v1404
  %vm1410 = vc.u32 %v1385, %v1404
  %v1411 = vadd.s32 %v1407, 1
  %v1412 = vsel %vm1410, %v1411, %v1407
  %v1413 = vadd.s32 %v1408, %v1412
  %v1414 = vadd.s32 %v1413, 536870912
  %v1415 = vshrl.u32 %v1414, 30
  %v1416 = vshll.u32 %v1415, 30
  %v1417 = vsub.s32 %v1413, %v1416
  %vm1418 = vcmp.lt.s32.totalorder %v1417, 0
  %v1419 = vsub.s32 0, %v1417
  %v1420 = vsel %vm1418, %v1419, %v1417
  %v1421 = vclz %v1420
  %v1422 = vsub.s32 %v1421, 2
  %vm1423 = vcmp.gt.s32.totalorder 0, %v1422
  %v1424 = vsel %vm1423, 0, %v1422
  %v1425 = vsub.s32 32, %v1424
  %v1426 = vshll.u32 %v1417, %v1424
  %v1427 = vshrl.u32 %v1409, %v1425
  %v1428 = vor.u32 %v1426, %v1427
  %v1429 = vsub.s32 4294967266, %v1424
  %v1430 = vadd.s32 %v1429, 127
  %v1431 = vshll.u32 %v1430, 23
  %v1432 = vor.u32 4788187, %v1431
  %v1433 = vand.u32 2147483647, %v1432
  %v1435 = vcvt.s32.f32 %v1428
  %v1436 = vmul.f32 %v1435, %v1433
  %v1437 = vxor.u32 %v1436, 2147483648
  %v1438 = vsel %vm1317, %v1437, %v1436
  %v1439 = vsub.s32 4, %v1415
  %v1440 = vsel %vm1317, %v1439, %v1415
  %v1441 = vsel %vm1316, %v1314, %v1438
  %v1442 = vsel %vm1316, 0, %v1440
  %v1443 = vmul.f32 %v1441, %v1441
  %v1444 = vmul.f32 %v1443, -0.001358992
  %v1445 = vadd.f32 %v1444, 0.041655596
  %v1446 = vmul.f32 %v1443, %v1445
  %v1447 = vadd.f32 %v1446, -0.4999988
  %v1448 = vmul.f32 %v1443, %v1447
  %v1449 = vadd.f32 1.0, %v1448
  %v1450 = vmul.f32 %v1441, %v1441
  %v1451 = vmul.f32 %v1450, -0.00019511016
  %v1452 = vadd.f32 %v1451, 0.008332121
  %v1453 = vmul.f32 %v1450, %v1452
  %v1454 = vadd.f32 %v1453, -0.16666654
  %v1455 = vmul.f32 %v1450, %v1454
  %v1456 = vadd.f32 %v1455, 1.0
  %v1457 = vmul.f32 %v1456, %v1441
  %vm1458 = vweird.f32 %v1314
  %v1459 = vadd.s32 %v1442, 3
  %v1460 = vand.u32 %v1459, 3
  %vm1461 = vcmp.lt.s32.totalorder %v1460, 2
  %vm1462 = vcmp.eq.s32.totalorder %v1460, 0
  %v1463 = vxor.u32 %v1457, 2147483648
  %v1464 = vsel %vm1462, %v1449, %v1463
  %vm1465 = vcmp.eq.s32.totalorder %v1460, 2
  %v1466 = vxor.u32 %v1449, 2147483648
  %v1467 = vsel %vm1465, %v1466, %v1457
  %v1468 = vsel %vm1461, %v1464, %v1467
  %v1469 = vsel %vm1458, nan, %v1468
  %v1470 = vmul.f32 %v1469, %v1469
  %v1471 = vsub.f32 1.0, %v1470
  %v1473 = vrot.slane %v1471, 1
  %v1475 = vmul.f32 %v1471, %v1473
  %v1476 = vrot.slane %v1471, 4
  %v1478 = vmul.f32 %v1471, %v1476
  %v1479 = vrot.slane %v1471, 6
  %v1481 = vmul.f32 %v1471, %v1479
  %v1483 = vrot.slane %v1475, 1
  %v1485 = vmul.f32 %v1470, %v1483
  %v1486 = vadd.f32 %v1283, %v1485
  %v1488 = vrot.slane %v1478, 1
  %v1490 = vmul.f32 %v1470, %v1488
  %v1491 = vadd.f32 %v1288, %v1490
  %v1493 = vrot.slane %v1481, 4
  %v1495 = vmul.f32 %v1470, %v1493
  %v1496 = vadd.f32 %v1293, %v1495
  %v1497 = vrot.slane %v1475, 4
  %v1499 = vmul.f32 %v1470, %v1497
  %v1500 = vadd.f32 %v1297, %v1499
  %v1501 = vrot.slane %v1475, 6
  %v1503 = vmul.f32 %v1470, %v1501
  %v1504 = vadd.f32 %v1301, %v1503
  %v1505 = vrot.slane %v1478, 6
  %v1507 = vmul.f32 %v1470, %v1505
  %v1508 = vadd.f32 %v1305, %v1507
  %v1509 = vrot.slane %v1481, 1
  %v1511 = vmul.f32 %v1470, %v1509
  %v1512 = vadd.f32 %v1309, %v1511
  %1513 = vset.pattern.permute.xlu0 5
  %1514 = vperm.xlu0 %1513, %v496
  %v1515 = vpop.permute.xlu0 %1514
  %v1517 = vmul.f32 %v495, %v1515
  %v1518 = vand.u32 2147483647, %v1517
  %vm1519 = vcmp.le.f32.partialorder %v1518, 0.7853982
  %vm1520 = vcmp.lt.s32.totalorder %v1517, 0
  %v1521 = vand.u32 %v1517, 2139095040
  %v1522 = vshrl.u32 %v1521, 23
  %v1523 = vsub.s32 %v1522, 127
  %v1524 = vand.u32 2147483647, %v1517
  %v1525 = vand.u32 %v1524, 8388607
  %v1526 = vor.u32 %v1525, 8388608
  %v1527 = vsub.s32 0, %v1526
  %v1528 = vadd.s32 %v1523, 1
  %vm1529 = vcmp.gt.s32.totalorder %v1528, 0
  %v1530 = vsel %vm1529, %v1528, 0
  %v1531 = vshrl.u32 %v1530, 5
  %v1532 = vand.u32 %v1530, 31
  %v1533 = vsub.s32 32, %v1532
  %v1534 = vshrl.u32 683565275, %v1533
  %v1535 = vshll.u32 683565275, %v1532
  %v1536 = vshrl.u32 2475754826, %v1533
  %v1537 = vor.u32 %v1535, %v1536
  %v1538 = vshll.u32 2475754826, %v1532
  %v1539 = vshrl.u32 2131351028, %v1533
  %v1540 = vor.u32 %v1538, %v1539
  %v1541 = vshll.u32 2131351028, %v1532
  %v1542 = vshrl.u32 2102212464, %v1533
  %v1543 = vor.u32 %v1541, %v1542
  %v1544 = vshll.u32 2102212464, %v1532
  %v1545 = vshrl.u32 920167782, %v1533
  %v1546 = vor.u32 %v1544, %v1545
  %v1547 = vshll.u32 920167782, %v1532
  %v1548 = vshrl.u32 1326507024, %v1533
  %v1549 = vor.u32 %v1547, %v1548
  %vm1550 = vcmp.lt.s32.totalorder %v1531, 1
  %vm1551 = vcmp.lt.s32.totalorder %v1531, 2
  %vm1552 = vcmp.lt.s32.totalorder %v1531, 3
  %vm1553 = vcmp.lt.s32.totalorder %v1531, 4
  %v1554 = vsel %vm1550, %v1534, %v1537
  %v1555 = vsel %vm1553, %v1543, 2102212464
  %v1556 = vsel %vm1552, %v1540, %v1555
  %v1557 = vsel %vm1551, %v1554, %v1556
  %v1558 = vsel %vm1550, %v1537, %v1540
  %v1559 = vsel %vm1553, %v1546, 920167782
  %v1560 = vsel %vm1552, %v1543, %v1559
  %v1561 = vsel %vm1551, %v1558, %v1560
  %v1562 = vsel %vm1550, %v1540, %v1543
  %v1563 = vsel %vm1553, %v1549, 1326507024
  %v1564 = vsel %vm1552, %v1546, %v1563
  %v1565 = vsel %vm1551, %v1562, %v1564
  %v1566 = vshll.u32 %v1526, 8
  %v1567 = vand.u32 %v1566, 65535
  %v1568 = vshrl.u32 %v1566, 16
  %v1569 = vand.u32 %v1565, 65535
  %v1570 = vshrl.u32 %v1565, 16
  %v1571 = vmul.u32 %v1567, %v1569
  %v1572 = vmul.u32 %v1567, %v1570
  %v1573 = vmul.u32 %v1568, %v1569
  %v1574 = vmul.u32 %v1568, %v1570
  %v1575 = vshll.u32 %v1572, 16
  %v1576 = vshrl.u32 %v1572, 16
  %v1577 = vshll.u32 %v1573, 16
  %v1578 = vshrl.u32 %v1573, 16
  %vm1579 = vc.u32 %v1571, %v1575
  %v1580 = vsel %vm1579, 1, 0
  %v1581 = vadd.s32 %v1571, %v1575
  %v1582 = vadd.s32 %v1574, %v1580
  %vm1583 = vc.u32 %v1581, %v1577
  %v1584 = vsel %vm1583, 1, 0
  %v1585 = vadd.s32 %v1581, %v1577
  %v1586 = vadd.s32 %v1582, %v1584
  %v1587 = vadd.s32 %v1586, %v1576
  %v1588 = vadd.s32 %v1587, %v1578
  %v1589 = vand.u32 %v1566, 65535
  %v1590 = vshrl.u32 %v1566, 16
  %v1591 = vand.u32 %v1561, 65535
  %v1592 = vshrl.u32 %v1561, 16
  %v1593 = vmul.u32 %v1589, %v1591
  %v1594 = vmul.u32 %v1589, %v1592
  %v1595 = vmul.u32 %v1590, %v1591
  %v1596 = vmul.u32 %v1590, %v1592
  %v1597 = vshll.u32 %v1594, 16
  %v1598 = vshrl.u32 %v1594, 16
  %v1599 = vshll.u32 %v1595, 16
  %v1600 = vshrl.u32 %v1595, 16
  %vm1601 = vc.u32 %v1593, %v1597
  %v1602 = vsel %vm1601, 1, 0
  %v1603 = vadd.s32 %v1593, %v1597
  %v1604 = vadd.s32 %v1596, %v1602
  %vm1605 = vc.u32 %v1603, %v1599
  %v1606 = vsel %vm1605, 1, 0
  %v1607 = vadd.s32 %v1603, %v1599
  %v1608 = vadd.s32 %v1604, %v1606
  %v1609 = vadd.s32 %v1608, %v1598
  %v1610 = vadd.s32 %v1609, %v1600
  %v1611 = vmul.u32 %v1566, %v1557
  %v1612 = vadd.s32 %v1588, %v1607
  %vm1613 = vc.u32 %v1588, %v1607
  %v1614 = vadd.s32 %v1610, 1
  %v1615 = vsel %vm1613, %v1614, %v1610
  %v1616 = vadd.s32 %v1611, %v1615
  %v1617 = vadd.s32 %v1616, 536870912
  %v1618 = vshrl.u32 %v1617, 30
  %v1619 = vshll.u32 %v1618, 30
  %v1620 = vsub.s32 %v1616, %v1619
  %vm1621 = vcmp.lt.s32.totalorder %v1620, 0
  %v1622 = vsub.s32 0, %v1620
  %v1623 = vsel %vm1621, %v1622, %v1620
  %v1624 = vclz %v1623
  %v1625 = vsub.s32 %v1624, 2
  %vm1626 = vcmp.gt.s32.totalorder 0, %v1625
  %v1627 = vsel %vm1626, 0, %v1625
  %v1628 = vsub.s32 32, %v1627
  %v1629 = vshll.u32 %v1620, %v1627
  %v1630 = vshrl.u32 %v1612, %v1628
  %v1631 = vor.u32 %v1629, %v1630
  %v1632 = vsub.s32 4294967266, %v1627
  %v1633 = vadd.s32 %v1632, 127
  %v1634 = vshll.u32 %v1633, 23
  %v1635 = vor.u32 4788187, %v1634
  %v1636 = vand.u32 2147483647, %v1635
  %v1638 = vcvt.s32.f32 %v1631
  %v1639 = vmul.f32 %v1638, %v1636
  %v1640 = vxor.u32 %v1639, 2147483648
  %v1641 = vsel %vm1520, %v1640, %v1639
  %v1642 = vsub.s32 4, %v1618
  %v1643 = vsel %vm1520, %v1642, %v1618
  %v1644 = vsel %vm1519, %v1517, %v1641
  %v1645 = vsel %vm1519, 0, %v1643
  %v1646 = vmul.f32 %v1644, %v1644
  %v1647 = vmul.f32 %v1646, -0.001358992
  %v1648 = vadd.f32 %v1647, 0.041655596
  %v1649 = vmul.f32 %v1646, %v1648
  %v1650 = vadd.f32 %v1649, -0.4999988
  %v1651 = vmul.f32 %v1646, %v1650
  %v1652 = vadd.f32 1.0, %v1651
  %v1653 = vmul.f32 %v1644, %v1644
  %v1654 = vmul.f32 %v1653, -0.00019511016
  %v1655 = vadd.f32 %v1654, 0.008332121
  %v1656 = vmul.f32 %v1653, %v1655
  %v1657 = vadd.f32 %v1656, -0.16666654
  %v1658 = vmul.f32 %v1653, %v1657
  %v1659 = vadd.f32 %v1658, 1.0
  %v1660 = vmul.f32 %v1659, %v1644
  %vm1661 = vweird.f32 %v1517
  %v1662 = vadd.s32 %v1645, 3
  %v1663 = vand.u32 %v1662, 3
  %vm1664 = vcmp.lt.s32.totalorder %v1663, 2
  %vm1665 = vcmp.eq.s32.totalorder %v1663, 0
  %v1666 = vxor.u32 %v1660, 2147483648
  %v1667 = vsel %vm1665, %v1652, %v1666
  %vm1668 = vcmp.eq.s32.totalorder %v1663, 2
  %v1669 = vxor.u32 %v1652, 2147483648
  %v1670 = vsel %vm1668, %v1669, %v1660
  %v1671 = vsel %vm1664, %v1667, %v1670
  %v1672 = vsel %vm1661, nan, %v1671
  %v1673 = vmul.f32 %v1672, %v1672
  %v1674 = vsub.f32 1.0, %v1673
  %v1676 = vrot.slane %v1674, 1
  %v1678 = vmul.f32 %v1674, %v1676
  %v1679 = vrot.slane %v1674, 4
  %v1681 = vmul.f32 %v1674, %v1679
  %v1682 = vrot.slane %v1674, 6
  %v1684 = vmul.f32 %v1674, %v1682
  %v1686 = vrot.slane %v1678, 1
  %v1688 = vmul.f32 %v1673, %v1686
  %v1689 = vadd.f32 %v1486, %v1688
  %v1691 = vrot.slane %v1681, 1
  %v1693 = vmul.f32 %v1673, %v1691
  %v1694 = vadd.f32 %v1491, %v1693
  %v1696 = vrot.slane %v1684, 4
  %v1698 = vmul.f32 %v1673, %v1696
  %v1699 = vadd.f32 %v1496, %v1698
  %v1700 = vrot.slane %v1678, 4
  %v1702 = vmul.f32 %v1673, %v1700
  %v1703 = vadd.f32 %v1500, %v1702
  %v1704 = vrot.slane %v1678, 6
  %v1706 = vmul.f32 %v1673, %v1704
  %v1707 = vadd.f32 %v1504, %v1706
  %v1708 = vrot.slane %v1681, 6
  %v1710 = vmul.f32 %v1673, %v1708
  %v1711 = vadd.f32 %v1508, %v1710
  %v1712 = vrot.slane %v1684, 1
  %v1714 = vmul.f32 %v1673, %v1712
  %v1715 = vadd.f32 %v1512, %v1714
  %v1716 = vmul.f32 %v1689, 0.16666667
  %v1717 = vmul.f32 %v1694, 0.16666667
  %v1718 = vmul.f32 %v1699, 0.16666667
  %v1719 = vmul.f32 %v1703, 0.16666667
  %v1720 = vmul.f32 %v1707, 0.16666667
  %v1721 = vmul.f32 %v1711, 0.16666667
  %v1722 = vmul.f32 %v1715, 0.16666667
  %v1724 = vrot.slane %v1717, 7
  %v1727 = vrot.slane %v1718, 6
  %v1730 = vrot.slane %v1719, 5
  %v1733 = vrot.slane %v1720, 7
  %v1736 = vrot.slane %v1721, 6
  %v1739 = vrot.slane %v1722, 5
  %v1742 = vrot.slane %v1716, 4
  %vm1744 = vcmask 1040384
  %v1745 = vsel %vm1744, %v1716, %v1724
  %v1746 = vsel %vm42, %v1745, %v1727
  %v1747 = vsel %vm115, %v1746, %v1730
  %vm1748 = vcmask 1043456
  %v1749 = vsel %vm1748, %v1747, %v1733
  %vm1750 = vcmask 1044480
  %v1751 = vsel %vm1750, %v1749, %v1736
  %vm1752 = vcmask 1045504
  %v1753 = vsel %vm1752, %v1751, %v1739
  %vm1754 = vcmask 1046528
  %v1755 = vsel %vm1754, %v1753, %v1742
  %1756 = vst [vmem:[%s8] sm:$0xff] %v1755
  // Predicated region
  $region34: #{qfnn_forward.2} parent=0 // pred_check
    _
  $region35: #{qfnn_forward.2} parent=0 // pred_check_branch
    %1758 = sbr.rel (0) target = $region37
  $region36: #{qfnn_forward.2} parent=0 // pred_region
    _
  $region37: #{qfnn_forward.2} parent=0 // pred_fallthru
    _
  // Predicated region
  $region38: #{qfnn_forward.2} parent=0 // pred_check
    _
  $region39: #{qfnn_forward.2} parent=0 // pred_check_branch
    %1760 = sbr.rel (0) target = $region41
  $region40: #{qfnn_forward.2} parent=0 // pred_region
    _
  $region41: #{qfnn_forward.2} parent=0 // pred_fallthru
    _

</llo_original>
